<compile_context>
chip_gen: v5e
topology: v5e:2x2
jax: 0.10.0
libtpu: 0.0.40
codegen_flags: <defaults>
</compile_context>

<pallas_src>
import numpy as np
import jax
import jax.numpy as jnp
from jax.experimental import pallas as pl
from jax.experimental.pallas import tpu as pltpu

VOCAB, EMB, HIDDEN, OUT = 16, 32, 32, 8
B, T = 2, 8
OUT_PAD = 128  # lane-dense output width (>= 128 lanes -> unmasked final store)


def bilstm_kernel(mask_ref, emb_ref, wih_ref, bih_ref,
                  whh_f_ref, whh_b_ref, wfc_ref, bfc_ref, out_ref):
    H = HIDDEN
    Bb = B
    Tt = T

    # Hoisted loads: small resident weights / mask live in vregs for the whole kernel.
    whh_f = whh_f_ref[...]            # (H, 4H)
    whh_b = whh_b_ref[...]            # (H, 4H)
    mask = mask_ref[...]              # (T*B, H): 1.0 while t < length else 0.0

    # Fused input projection for BOTH directions (+ bias): one (T*B, E) x (E, 8H) MXU pass.
    # Lanes [0, 4H) are the forward gates, [4H, 8H) the backward gates.
    xp = (jnp.dot(emb_ref[...], wih_ref[...], preferred_element_type=jnp.float32)
          + bih_ref[...])             # (T*B, 8H)

    def gate_update(gates, c):
        # PyTorch gate order (i, f, g, o).  One sigmoid + one tanh push over the full fused
        # slab, then H-wide lane slices -> 3 EUP pushes per direction per step (incl. tanh(c)).
        sg = jax.nn.sigmoid(gates)
        tg = jnp.tanh(gates)
        i_g = sg[:, 0 * H:1 * H]
        f_g = sg[:, 1 * H:2 * H]
        g_g = tg[:, 2 * H:3 * H]
        o_g = sg[:, 3 * H:4 * H]
        c_new = f_g * c + i_g * g_g
        h_new = o_g * jnp.tanh(c_new)
        return h_new, c_new

    zeros = jnp.zeros((Bb, H), jnp.float32)
    h_f, c_f = zeros, zeros
    h_b, c_b = zeros, zeros
    hs_f = [None] * Tt
    hs_b = [None] * Tt

    # Fully static (unrolled) fused fwd/bwd recurrence: per step, one (B, H) x (H, 4H) dot per
    # direction plus gate math; two independent dependency chains for the VLIW scheduler.  All
    # per-step operands are static vreg slices -- no VMEM access on the serial chain.
    for i in range(Tt):
        t_f = i
        t_b = Tt - 1 - i

        # Forward chain at t_f.  No carry-freeze: outputs past `length` are masked post-loop
        # and the final hidden/cell states are never returned.
        gates_f = xp[t_f * Bb:(t_f + 1) * Bb, 0:4 * H] + jnp.dot(
            h_f, whh_f, preferred_element_type=jnp.float32)
        h_f, c_f = gate_update(gates_f, c_f)
        hs_f[t_f] = h_f

        # Backward chain at t_b.  Carry-freeze keeps the state at zero until t_b < length so
        # the reverse recurrence effectively starts at t = length - 1 (packed semantics).
        gates_b = xp[t_b * Bb:(t_b + 1) * Bb, 4 * H:8 * H] + jnp.dot(
            h_b, whh_b, preferred_element_type=jnp.float32)
        h_bn, c_bn = gate_update(gates_b, c_b)
        hs_b[t_b] = h_bn
        m_b = mask[t_b * Bb:(t_b + 1) * Bb, :]
        h_b = h_b + m_b * (h_bn - h_b)
        c_b = c_b + m_b * (c_bn - c_b)

    # Post-loop: apply the packed-sequence mask once (single VPU slab op), then one fused
    # (T*B, 2H) x (2H, 128) output FC and a single lane-dense contiguous store.
    hf = jnp.concatenate(hs_f, axis=0) * mask       # (T*B, H)
    hb = jnp.concatenate(hs_b, axis=0) * mask       # (T*B, H)
    h_cat = jnp.concatenate([hf, hb], axis=1)       # (T*B, 2H)
    out_ref[...] = (jnp.dot(h_cat, wfc_ref[...], preferred_element_type=jnp.float32)
                    + bfc_ref[...])


def bilstm_forward(x, lengths, p):
    Bb, Tt = x.shape
    H = HIDDEN

    # Embedding gather + layout prep is cheap host/XLA glue.
    emb = jnp.take(p["embedding"], x, axis=0)                          # (B, T, E)
    emb2d = (jnp.transpose(emb, (1, 0, 2))                             # time-major (T, B, E)
             .reshape(Tt * Bb, EMB).astype(jnp.float32))               # (T*B, E)

    lengths = lengths.astype(jnp.int32)
    # Pre-broadcast mask (review item 3): (T*B, H) rows, 1.0 while t < length else 0.0.
    mask = (jnp.arange(Tt, dtype=jnp.int32)[:, None]
            < lengths[None, :]).astype(jnp.float32)                    # (T, B)
    mask2d = jnp.broadcast_to(mask[:, :, None], (Tt, Bb, H)).reshape(Tt * Bb, H)

    # Fuse the 4 gates lane-dense: (4, K, H) -> (K, 4H); both directions side by side (E, 8H).
    fuse_w = lambda w: jnp.transpose(w, (1, 0, 2)).reshape(w.shape[1], 4 * H)
    fuse_b = lambda b: jnp.transpose(b, (1, 0, 2)).reshape(1, 4 * H)
    wih = jnp.concatenate([fuse_w(p["wih_f"]), fuse_w(p["wih_b"])], axis=1)   # (E, 8H)
    bih = jnp.concatenate([fuse_b(p["b_f"]), fuse_b(p["b_b"])], axis=1)       # (1, 8H)

    # Stack + lane-pad the output FC so the kernel's final store is lane-dense (128 wide).
    wfc = jnp.concatenate([p["wfc_f"], p["wfc_b"]], axis=0)                   # (2H, OUT)
    wfc = jnp.pad(wfc, ((0, 0), (0, OUT_PAD - OUT)))                          # (2H, 128)
    bfc = jnp.pad(p["b_fc"], ((0, 0), (0, OUT_PAD - OUT)))                    # (1, 128)

    out2d = pl.pallas_call(
        bilstm_kernel,
        out_shape=jax.ShapeDtypeStruct((Tt * Bb, OUT_PAD), jnp.float32),
        in_specs=[pl.BlockSpec(memory_space=pltpu.MemorySpace.VMEM)] * 8,
        out_specs=pl.BlockSpec(memory_space=pltpu.MemorySpace.VMEM),
    )(mask2d, emb2d, wih, bih,
      fuse_w(p["whh_f"]), fuse_w(p["whh_b"]), wfc, bfc)

    out = out2d[:, :OUT].reshape(Tt, Bb, OUT)                                 # (T, B, OUT)
    return jnp.transpose(out, (1, 0, 2))                                      # (B, T, OUT)


def init_params(key):
    ks = jax.random.split(key, 10)
    bound = 1.0 / np.sqrt(HIDDEN)
    u = lambda k, shape: jax.random.uniform(k, shape, jnp.float32, -bound, bound)
    return dict(
        embedding=jax.random.normal(ks[0], (VOCAB, EMB), jnp.float32),
        wih_f=u(ks[1], (4, EMB, HIDDEN)),
        whh_f=u(ks[2], (4, HIDDEN, HIDDEN)),
        b_f=u(ks[3], (4, 1, HIDDEN)),
        wih_b=u(ks[4], (4, EMB, HIDDEN)),
        whh_b=u(ks[5], (4, HIDDEN, HIDDEN)),
        b_b=u(ks[6], (4, 1, HIDDEN)),
        wfc_f=u(ks[7], (HIDDEN, OUT)),
        wfc_b=u(ks[8], (HIDDEN, OUT)),
        b_fc=u(ks[9], (1, OUT)),
    )


def _sigmoid(z):
    return 1.0 / (1.0 + np.exp(-z))


def reference_forward(x, lengths, p):
    emb = np.asarray(jnp.take(p["embedding"], x, axis=0), dtype=np.float32)  # (B, T, E)

    def run_dir(wih, whh, b, reverse):
        wih, whh, b = (np.asarray(a, np.float32) for a in (wih, whh, b))
        out = np.zeros((B, T, HIDDEN), np.float32)
        for bi in range(B):
            L = int(lengths[bi])
            h = np.zeros(HIDDEN, np.float32)
            c = np.zeros(HIDDEN, np.float32)
            ts = range(L - 1, -1, -1) if reverse else range(L)
            for t in ts:
                x_t = emb[bi, t]
                i = _sigmoid(x_t @ wih[0] + h @ whh[0] + b[0, 0])
                f = _sigmoid(x_t @ wih[1] + h @ whh[1] + b[1, 0])
                g = np.tanh(x_t @ wih[2] + h @ whh[2] + b[2, 0])
                o = _sigmoid(x_t @ wih[3] + h @ whh[3] + b[3, 0])
                c = f * c + i * g
                h = o * np.tanh(c)
                out[bi, t] = h
        return out

    out_f = run_dir(p["wih_f"], p["whh_f"], p["b_f"], reverse=False)
    out_b = run_dir(p["wih_b"], p["whh_b"], p["b_b"], reverse=True)
    scores = (out_f @ np.asarray(p["wfc_f"], np.float32)
              + out_b @ np.asarray(p["wfc_b"], np.float32)
              + np.asarray(p["b_fc"], np.float32))
    return scores


if __name__ == "__main__":
    params = init_params(jax.random.PRNGKey(0))
    x = jax.random.randint(jax.random.PRNGKey(1), (B, T), 0, VOCAB, dtype=jnp.int32)
    # pack_padded_sequence requires lengths sorted in decreasing order.
    lengths = jnp.array([8, 5], dtype=jnp.int32)

    scores = bilstm_forward(x, lengths, params)
    scores = jax.block_until_ready(scores)

    ref = reference_forward(np.asarray(x), np.asarray(lengths), params)
    err = float(np.max(np.abs(np.asarray(scores) - ref)))
    assert scores.shape == (B, T, OUT), scores.shape
    assert err < 1e-4, f"max abs error {err}"
    print("KERNEL_OK")
</pallas_src>

<mosaic_0001>
module attributes {stable_mosaic.version = 11 : i64} {
  func.func @bilstm_kernel(%arg0: memref<16x32xf32, #tpu.memory_space<vmem>>, %arg1: memref<16x32xf32, #tpu.memory_space<vmem>>, %arg2: memref<32x256xf32, #tpu.memory_space<vmem>>, %arg3: memref<1x256xf32, #tpu.memory_space<vmem>>, %arg4: memref<32x128xf32, #tpu.memory_space<vmem>>, %arg5: memref<32x128xf32, #tpu.memory_space<vmem>>, %arg6: memref<64x128xf32, #tpu.memory_space<vmem>>, %arg7: memref<1x128xf32, #tpu.memory_space<vmem>>, %arg8: memref<16x128xf32, #tpu.memory_space<vmem>>) attributes {dimension_semantics = [], scalar_prefetch = 0 : i64, scratch_operands = 0 : i64, tpu.core_type = #tpu.core_type<tc>} {
    %c0 = arith.constant 0 : index
    %c0_0 = arith.constant 0 : index
    %0 = vector.load %arg4[%c0, %c0_0] : memref<32x128xf32, #tpu.memory_space<vmem>>, vector<32x128xf32>
    %c0_1 = arith.constant 0 : index
    %c0_2 = arith.constant 0 : index
    %1 = vector.load %arg5[%c0_1, %c0_2] : memref<32x128xf32, #tpu.memory_space<vmem>>, vector<32x128xf32>
    %c0_3 = arith.constant 0 : index
    %c0_4 = arith.constant 0 : index
    %2 = vector.load %arg0[%c0_3, %c0_4] : memref<16x32xf32, #tpu.memory_space<vmem>>, vector<16x32xf32>
    %c0_5 = arith.constant 0 : index
    %c0_6 = arith.constant 0 : index
    %3 = vector.load %arg1[%c0_5, %c0_6] : memref<16x32xf32, #tpu.memory_space<vmem>>, vector<16x32xf32>
    %c0_7 = arith.constant 0 : index
    %c0_8 = arith.constant 0 : index
    %4 = vector.load %arg2[%c0_7, %c0_8] : memref<32x256xf32, #tpu.memory_space<vmem>>, vector<32x256xf32>
    %cst = arith.constant dense<0.000000e+00> : vector<16x256xf32>
    %5 = tpu.matmul %3, %4, %cst {dimension_numbers = #tpu.dot_dimension_numbers<[1], [0], [0], [1], [0, 0, 1, 1], [], []>} : vector<16x32xf32>, vector<32x256xf32>, vector<16x256xf32> -> vector<16x256xf32>
    %c0_9 = arith.constant 0 : index
    %c0_10 = arith.constant 0 : index
    %6 = vector.load %arg3[%c0_9, %c0_10] : memref<1x256xf32, #tpu.memory_space<vmem>>, vector<1x256xf32>
    %7 = vector.broadcast %6 : vector<1x256xf32> to vector<16x256xf32>
    %8 = arith.addf %5, %7 : vector<16x256xf32>
    %cst_11 = arith.constant 0.000000e+00 : f32
    %9 = vector.broadcast %cst_11 : f32 to vector<2x32xf32>
    %10 = vector.extract_strided_slice %8 {offsets = [0, 0], sizes = [2, 128], strides = [1, 1]} : vector<16x256xf32> to vector<2x128xf32>
    %cst_12 = arith.constant dense<0.000000e+00> : vector<2x128xf32>
    %11 = tpu.matmul %9, %0, %cst_12 {dimension_numbers = #tpu.dot_dimension_numbers<[1], [0], [0], [1], [0, 0, 1, 1], [], []>} : vector<2x32xf32>, vector<32x128xf32>, vector<2x128xf32> -> vector<2x128xf32>
    %12 = arith.addf %10, %11 : vector<2x128xf32>
    %13 = arith.negf %12 : vector<2x128xf32>
    %14 = math.exp %13 : vector<2x128xf32>
    %cst_13 = arith.constant 1.000000e+00 : f32
    %15 = vector.broadcast %cst_13 : f32 to vector<2x128xf32>
    %16 = arith.addf %15, %14 : vector<2x128xf32>
    %17 = arith.divf %15, %16 : vector<2x128xf32>
    %18 = math.tanh %12 : vector<2x128xf32>
    %19 = vector.extract_strided_slice %17 {offsets = [0, 0], sizes = [2, 32], strides = [1, 1]} : vector<2x128xf32> to vector<2x32xf32>
    %20 = vector.extract_strided_slice %17 {offsets = [0, 32], sizes = [2, 32], strides = [1, 1]} : vector<2x128xf32> to vector<2x32xf32>
    %21 = vector.extract_strided_slice %18 {offsets = [0, 64], sizes = [2, 32], strides = [1, 1]} : vector<2x128xf32> to vector<2x32xf32>
    %22 = vector.extract_strided_slice %17 {offsets = [0, 96], sizes = [2, 32], strides = [1, 1]} : vector<2x128xf32> to vector<2x32xf32>
    %23 = arith.mulf %20, %9 : vector<2x32xf32>
    %24 = arith.mulf %19, %21 : vector<2x32xf32>
    %25 = arith.addf %23, %24 : vector<2x32xf32>
    %26 = math.tanh %25 : vector<2x32xf32>
    %27 = arith.mulf %22, %26 : vector<2x32xf32>
    %28 = vector.extract_strided_slice %8 {offsets = [14, 128], sizes = [2, 128], strides = [1, 1]} : vector<16x256xf32> to vector<2x128xf32>
    %cst_14 = arith.constant dense<0.000000e+00> : vector<2x128xf32>
    %29 = tpu.matmul %9, %1, %cst_14 {dimension_numbers = #tpu.dot_dimension_numbers<[1], [0], [0], [1], [0, 0, 1, 1], [], []>} : vector<2x32xf32>, vector<32x128xf32>, vector<2x128xf32> -> vector<2x128xf32>
    %30 = arith.addf %28, %29 : vector<2x128xf32>
    %31 = arith.negf %30 : vector<2x128xf32>
    %32 = math.exp %31 : vector<2x128xf32>
    %cst_15 = arith.constant 1.000000e+00 : f32
    %33 = vector.broadcast %cst_15 : f32 to vector<2x128xf32>
    %34 = arith.addf %33, %32 : vector<2x128xf32>
    %35 = arith.divf %33, %34 : vector<2x128xf32>
    %36 = math.tanh %30 : vector<2x128xf32>
    %37 = vector.extract_strided_slice %35 {offsets = [0, 0], sizes = [2, 32], strides = [1, 1]} : vector<2x128xf32> to vector<2x32xf32>
    %38 = vector.extract_strided_slice %35 {offsets = [0, 32], sizes = [2, 32], strides = [1, 1]} : vector<2x128xf32> to vector<2x32xf32>
    %39 = vector.extract_strided_slice %36 {offsets = [0, 64], sizes = [2, 32], strides = [1, 1]} : vector<2x128xf32> to vector<2x32xf32>
    %40 = vector.extract_strided_slice %35 {offsets = [0, 96], sizes = [2, 32], strides = [1, 1]} : vector<2x128xf32> to vector<2x32xf32>
    %41 = arith.mulf %38, %9 : vector<2x32xf32>
    %42 = arith.mulf %37, %39 : vector<2x32xf32>
    %43 = arith.addf %41, %42 : vector<2x32xf32>
    %44 = math.tanh %43 : vector<2x32xf32>
    %45 = arith.mulf %40, %44 : vector<2x32xf32>
    %46 = vector.extract_strided_slice %2 {offsets = [14, 0], sizes = [2, 32], strides = [1, 1]} : vector<16x32xf32> to vector<2x32xf32>
    %47 = arith.subf %45, %9 : vector<2x32xf32>
    %48 = arith.mulf %46, %47 : vector<2x32xf32>
    %49 = arith.addf %9, %48 : vector<2x32xf32>
    %50 = arith.subf %43, %9 : vector<2x32xf32>
    %51 = arith.mulf %46, %50 : vector<2x32xf32>
    %52 = arith.addf %9, %51 : vector<2x32xf32>
    %53 = vector.extract_strided_slice %8 {offsets = [2, 0], sizes = [2, 128], strides = [1, 1]} : vector<16x256xf32> to vector<2x128xf32>
    %cst_16 = arith.constant dense<0.000000e+00> : vector<2x128xf32>
    %54 = tpu.matmul %27, %0, %cst_16 {dimension_numbers = #tpu.dot_dimension_numbers<[1], [0], [0], [1], [0, 0, 1, 1], [], []>} : vector<2x32xf32>, vector<32x128xf32>, vector<2x128xf32> -> vector<2x128xf32>
    %55 = arith.addf %53, %54 : vector<2x128xf32>
    %56 = arith.negf %55 : vector<2x128xf32>
    %57 = math.exp %56 : vector<2x128xf32>
    %cst_17 = arith.constant 1.000000e+00 : f32
    %58 = vector.broadcast %cst_17 : f32 to vector<2x128xf32>
    %59 = arith.addf %58, %57 : vector<2x128xf32>
    %60 = arith.divf %58, %59 : vector<2x128xf32>
    %61 = math.tanh %55 : vector<2x128xf32>
    %62 = vector.extract_strided_slice %60 {offsets = [0, 0], sizes = [2, 32], strides = [1, 1]} : vector<2x128xf32> to vector<2x32xf32>
    %63 = vector.extract_strided_slice %60 {offsets = [0, 32], sizes = [2, 32], strides = [1, 1]} : vector<2x128xf32> to vector<2x32xf32>
    %64 = vector.extract_strided_slice %61 {offsets = [0, 64], sizes = [2, 32], strides = [1, 1]} : vector<2x128xf32> to vector<2x32xf32>
    %65 = vector.extract_strided_slice %60 {offsets = [0, 96], sizes = [2, 32], strides = [1, 1]} : vector<2x128xf32> to vector<2x32xf32>
    %66 = arith.mulf %63, %25 : vector<2x32xf32>
    %67 = arith.mulf %62, %64 : vector<2x32xf32>
    %68 = arith.addf %66, %67 : vector<2x32xf32>
    %69 = math.tanh %68 : vector<2x32xf32>
    %70 = arith.mulf %65, %69 : vector<2x32xf32>
    %71 = vector.extract_strided_slice %8 {offsets = [12, 128], sizes = [2, 128], strides = [1, 1]} : vector<16x256xf32> to vector<2x128xf32>
    %cst_18 = arith.constant dense<0.000000e+00> : vector<2x128xf32>
    %72 = tpu.matmul %49, %1, %cst_18 {dimension_numbers = #tpu.dot_dimension_numbers<[1], [0], [0], [1], [0, 0, 1, 1], [], []>} : vector<2x32xf32>, vector<32x128xf32>, vector<2x128xf32> -> vector<2x128xf32>
    %73 = arith.addf %71, %72 : vector<2x128xf32>
    %74 = arith.negf %73 : vector<2x128xf32>
    %75 = math.exp %74 : vector<2x128xf32>
    %cst_19 = arith.constant 1.000000e+00 : f32
    %76 = vector.broadcast %cst_19 : f32 to vector<2x128xf32>
    %77 = arith.addf %76, %75 : vector<2x128xf32>
    %78 = arith.divf %76, %77 : vector<2x128xf32>
    %79 = math.tanh %73 : vector<2x128xf32>
    %80 = vector.extract_strided_slice %78 {offsets = [0, 0], sizes = [2, 32], strides = [1, 1]} : vector<2x128xf32> to vector<2x32xf32>
    %81 = vector.extract_strided_slice %78 {offsets = [0, 32], sizes = [2, 32], strides = [1, 1]} : vector<2x128xf32> to vector<2x32xf32>
    %82 = vector.extract_strided_slice %79 {offsets = [0, 64], sizes = [2, 32], strides = [1, 1]} : vector<2x128xf32> to vector<2x32xf32>
    %83 = vector.extract_strided_slice %78 {offsets = [0, 96], sizes = [2, 32], strides = [1, 1]} : vector<2x128xf32> to vector<2x32xf32>
    %84 = arith.mulf %81, %52 : vector<2x32xf32>
    %85 = arith.mulf %80, %82 : vector<2x32xf32>
    %86 = arith.addf %84, %85 : vector<2x32xf32>
    %87 = math.tanh %86 : vector<2x32xf32>
    %88 = arith.mulf %83, %87 : vector<2x32xf32>
    %89 = vector.extract_strided_slice %2 {offsets = [12, 0], sizes = [2, 32], strides = [1, 1]} : vector<16x32xf32> to vector<2x32xf32>
    %90 = arith.subf %88, %49 : vector<2x32xf32>
    %91 = arith.mulf %89, %90 : vector<2x32xf32>
    %92 = arith.addf %49, %91 : vector<2x32xf32>
    %93 = arith.subf %86, %52 : vector<2x32xf32>
    %94 = arith.mulf %89, %93 : vector<2x32xf32>
    %95 = arith.addf %52, %94 : vector<2x32xf32>
    %96 = vector.extract_strided_slice %8 {offsets = [4, 0], sizes = [2, 128], strides = [1, 1]} : vector<16x256xf32> to vector<2x128xf32>
    %cst_20 = arith.constant dense<0.000000e+00> : vector<2x128xf32>
    %97 = tpu.matmul %70, %0, %cst_20 {dimension_numbers = #tpu.dot_dimension_numbers<[1], [0], [0], [1], [0, 0, 1, 1], [], []>} : vector<2x32xf32>, vector<32x128xf32>, vector<2x128xf32> -> vector<2x128xf32>
    %98 = arith.addf %96, %97 : vector<2x128xf32>
    %99 = arith.negf %98 : vector<2x128xf32>
    %100 = math.exp %99 : vector<2x128xf32>
    %cst_21 = arith.constant 1.000000e+00 : f32
    %101 = vector.broadcast %cst_21 : f32 to vector<2x128xf32>
    %102 = arith.addf %101, %100 : vector<2x128xf32>
    %103 = arith.divf %101, %102 : vector<2x128xf32>
    %104 = math.tanh %98 : vector<2x128xf32>
    %105 = vector.extract_strided_slice %103 {offsets = [0, 0], sizes = [2, 32], strides = [1, 1]} : vector<2x128xf32> to vector<2x32xf32>
    %106 = vector.extract_strided_slice %103 {offsets = [0, 32], sizes = [2, 32], strides = [1, 1]} : vector<2x128xf32> to vector<2x32xf32>
    %107 = vector.extract_strided_slice %104 {offsets = [0, 64], sizes = [2, 32], strides = [1, 1]} : vector<2x128xf32> to vector<2x32xf32>
    %108 = vector.extract_strided_slice %103 {offsets = [0, 96], sizes = [2, 32], strides = [1, 1]} : vector<2x128xf32> to vector<2x32xf32>
    %109 = arith.mulf %106, %68 : vector<2x32xf32>
    %110 = arith.mulf %105, %107 : vector<2x32xf32>
    %111 = arith.addf %109, %110 : vector<2x32xf32>
    %112 = math.tanh %111 : vector<2x32xf32>
    %113 = arith.mulf %108, %112 : vector<2x32xf32>
    %114 = vector.extract_strided_slice %8 {offsets = [10, 128], sizes = [2, 128], strides = [1, 1]} : vector<16x256xf32> to vector<2x128xf32>
    %cst_22 = arith.constant dense<0.000000e+00> : vector<2x128xf32>
    %115 = tpu.matmul %92, %1, %cst_22 {dimension_numbers = #tpu.dot_dimension_numbers<[1], [0], [0], [1], [0, 0, 1, 1], [], []>} : vector<2x32xf32>, vector<32x128xf32>, vector<2x128xf32> -> vector<2x128xf32>
    %116 = arith.addf %114, %115 : vector<2x128xf32>
    %117 = arith.negf %116 : vector<2x128xf32>
    %118 = math.exp %117 : vector<2x128xf32>
    %cst_23 = arith.constant 1.000000e+00 : f32
    %119 = vector.broadcast %cst_23 : f32 to vector<2x128xf32>
    %120 = arith.addf %119, %118 : vector<2x128xf32>
    %121 = arith.divf %119, %120 : vector<2x128xf32>
    %122 = math.tanh %116 : vector<2x128xf32>
    %123 = vector.extract_strided_slice %121 {offsets = [0, 0], sizes = [2, 32], strides = [1, 1]} : vector<2x128xf32> to vector<2x32xf32>
    %124 = vector.extract_strided_slice %121 {offsets = [0, 32], sizes = [2, 32], strides = [1, 1]} : vector<2x128xf32> to vector<2x32xf32>
    %125 = vector.extract_strided_slice %122 {offsets = [0, 64], sizes = [2, 32], strides = [1, 1]} : vector<2x128xf32> to vector<2x32xf32>
    %126 = vector.extract_strided_slice %121 {offsets = [0, 96], sizes = [2, 32], strides = [1, 1]} : vector<2x128xf32> to vector<2x32xf32>
    %127 = arith.mulf %124, %95 : vector<2x32xf32>
    %128 = arith.mulf %123, %125 : vector<2x32xf32>
    %129 = arith.addf %127, %128 : vector<2x32xf32>
    %130 = math.tanh %129 : vector<2x32xf32>
    %131 = arith.mulf %126, %130 : vector<2x32xf32>
    %132 = vector.extract_strided_slice %2 {offsets = [10, 0], sizes = [2, 32], strides = [1, 1]} : vector<16x32xf32> to vector<2x32xf32>
    %133 = arith.subf %131, %92 : vector<2x32xf32>
    %134 = arith.mulf %132, %133 : vector<2x32xf32>
    %135 = arith.addf %92, %134 : vector<2x32xf32>
    %136 = arith.subf %129, %95 : vector<2x32xf32>
    %137 = arith.mulf %132, %136 : vector<2x32xf32>
    %138 = arith.addf %95, %137 : vector<2x32xf32>
    %139 = vector.extract_strided_slice %8 {offsets = [6, 0], sizes = [2, 128], strides = [1, 1]} : vector<16x256xf32> to vector<2x128xf32>
    %cst_24 = arith.constant dense<0.000000e+00> : vector<2x128xf32>
    %140 = tpu.matmul %113, %0, %cst_24 {dimension_numbers = #tpu.dot_dimension_numbers<[1], [0], [0], [1], [0, 0, 1, 1], [], []>} : vector<2x32xf32>, vector<32x128xf32>, vector<2x128xf32> -> vector<2x128xf32>
    %141 = arith.addf %139, %140 : vector<2x128xf32>
    %142 = arith.negf %141 : vector<2x128xf32>
    %143 = math.exp %142 : vector<2x128xf32>
    %cst_25 = arith.constant 1.000000e+00 : f32
    %144 = vector.broadcast %cst_25 : f32 to vector<2x128xf32>
    %145 = arith.addf %144, %143 : vector<2x128xf32>
    %146 = arith.divf %144, %145 : vector<2x128xf32>
    %147 = math.tanh %141 : vector<2x128xf32>
    %148 = vector.extract_strided_slice %146 {offsets = [0, 0], sizes = [2, 32], strides = [1, 1]} : vector<2x128xf32> to vector<2x32xf32>
    %149 = vector.extract_strided_slice %146 {offsets = [0, 32], sizes = [2, 32], strides = [1, 1]} : vector<2x128xf32> to vector<2x32xf32>
    %150 = vector.extract_strided_slice %147 {offsets = [0, 64], sizes = [2, 32], strides = [1, 1]} : vector<2x128xf32> to vector<2x32xf32>
    %151 = vector.extract_strided_slice %146 {offsets = [0, 96], sizes = [2, 32], strides = [1, 1]} : vector<2x128xf32> to vector<2x32xf32>
    %152 = arith.mulf %149, %111 : vector<2x32xf32>
    %153 = arith.mulf %148, %150 : vector<2x32xf32>
    %154 = arith.addf %152, %153 : vector<2x32xf32>
    %155 = math.tanh %154 : vector<2x32xf32>
    %156 = arith.mulf %151, %155 : vector<2x32xf32>
    %157 = vector.extract_strided_slice %8 {offsets = [8, 128], sizes = [2, 128], strides = [1, 1]} : vector<16x256xf32> to vector<2x128xf32>
    %cst_26 = arith.constant dense<0.000000e+00> : vector<2x128xf32>
    %158 = tpu.matmul %135, %1, %cst_26 {dimension_numbers = #tpu.dot_dimension_numbers<[1], [0], [0], [1], [0, 0, 1, 1], [], []>} : vector<2x32xf32>, vector<32x128xf32>, vector<2x128xf32> -> vector<2x128xf32>
    %159 = arith.addf %157, %158 : vector<2x128xf32>
    %160 = arith.negf %159 : vector<2x128xf32>
    %161 = math.exp %160 : vector<2x128xf32>
    %cst_27 = arith.constant 1.000000e+00 : f32
    %162 = vector.broadcast %cst_27 : f32 to vector<2x128xf32>
    %163 = arith.addf %162, %161 : vector<2x128xf32>
    %164 = arith.divf %162, %163 : vector<2x128xf32>
    %165 = math.tanh %159 : vector<2x128xf32>
    %166 = vector.extract_strided_slice %164 {offsets = [0, 0], sizes = [2, 32], strides = [1, 1]} : vector<2x128xf32> to vector<2x32xf32>
    %167 = vector.extract_strided_slice %164 {offsets = [0, 32], sizes = [2, 32], strides = [1, 1]} : vector<2x128xf32> to vector<2x32xf32>
    %168 = vector.extract_strided_slice %165 {offsets = [0, 64], sizes = [2, 32], strides = [1, 1]} : vector<2x128xf32> to vector<2x32xf32>
    %169 = vector.extract_strided_slice %164 {offsets = [0, 96], sizes = [2, 32], strides = [1, 1]} : vector<2x128xf32> to vector<2x32xf32>
    %170 = arith.mulf %167, %138 : vector<2x32xf32>
    %171 = arith.mulf %166, %168 : vector<2x32xf32>
    %172 = arith.addf %170, %171 : vector<2x32xf32>
    %173 = math.tanh %172 : vector<2x32xf32>
    %174 = arith.mulf %169, %173 : vector<2x32xf32>
    %175 = vector.extract_strided_slice %2 {offsets = [8, 0], sizes = [2, 32], strides = [1, 1]} : vector<16x32xf32> to vector<2x32xf32>
    %176 = arith.subf %174, %135 : vector<2x32xf32>
    %177 = arith.mulf %175, %176 : vector<2x32xf32>
    %178 = arith.addf %135, %177 : vector<2x32xf32>
    %179 = arith.subf %172, %138 : vector<2x32xf32>
    %180 = arith.mulf %175, %179 : vector<2x32xf32>
    %181 = arith.addf %138, %180 : vector<2x32xf32>
    %182 = vector.extract_strided_slice %8 {offsets = [8, 0], sizes = [2, 128], strides = [1, 1]} : vector<16x256xf32> to vector<2x128xf32>
    %cst_28 = arith.constant dense<0.000000e+00> : vector<2x128xf32>
    %183 = tpu.matmul %156, %0, %cst_28 {dimension_numbers = #tpu.dot_dimension_numbers<[1], [0], [0], [1], [0, 0, 1, 1], [], []>} : vector<2x32xf32>, vector<32x128xf32>, vector<2x128xf32> -> vector<2x128xf32>
    %184 = arith.addf %182, %183 : vector<2x128xf32>
    %185 = arith.negf %184 : vector<2x128xf32>
    %186 = math.exp %185 : vector<2x128xf32>
    %cst_29 = arith.constant 1.000000e+00 : f32
    %187 = vector.broadcast %cst_29 : f32 to vector<2x128xf32>
    %188 = arith.addf %187, %186 : vector<2x128xf32>
    %189 = arith.divf %187, %188 : vector<2x128xf32>
    %190 = math.tanh %184 : vector<2x128xf32>
    %191 = vector.extract_strided_slice %189 {offsets = [0, 0], sizes = [2, 32], strides = [1, 1]} : vector<2x128xf32> to vector<2x32xf32>
    %192 = vector.extract_strided_slice %189 {offsets = [0, 32], sizes = [2, 32], strides = [1, 1]} : vector<2x128xf32> to vector<2x32xf32>
    %193 = vector.extract_strided_slice %190 {offsets = [0, 64], sizes = [2, 32], strides = [1, 1]} : vector<2x128xf32> to vector<2x32xf32>
    %194 = vector.extract_strided_slice %189 {offsets = [0, 96], sizes = [2, 32], strides = [1, 1]} : vector<2x128xf32> to vector<2x32xf32>
    %195 = arith.mulf %192, %154 : vector<2x32xf32>
    %196 = arith.mulf %191, %193 : vector<2x32xf32>
    %197 = arith.addf %195, %196 : vector<2x32xf32>
    %198 = math.tanh %197 : vector<2x32xf32>
    %199 = arith.mulf %194, %198 : vector<2x32xf32>
    %200 = vector.extract_strided_slice %8 {offsets = [6, 128], sizes = [2, 128], strides = [1, 1]} : vector<16x256xf32> to vector<2x128xf32>
    %cst_30 = arith.constant dense<0.000000e+00> : vector<2x128xf32>
    %201 = tpu.matmul %178, %1, %cst_30 {dimension_numbers = #tpu.dot_dimension_numbers<[1], [0], [0], [1], [0, 0, 1, 1], [], []>} : vector<2x32xf32>, vector<32x128xf32>, vector<2x128xf32> -> vector<2x128xf32>
    %202 = arith.addf %200, %201 : vector<2x128xf32>
    %203 = arith.negf %202 : vector<2x128xf32>
    %204 = math.exp %203 : vector<2x128xf32>
    %cst_31 = arith.constant 1.000000e+00 : f32
    %205 = vector.broadcast %cst_31 : f32 to vector<2x128xf32>
    %206 = arith.addf %205, %204 : vector<2x128xf32>
    %207 = arith.divf %205, %206 : vector<2x128xf32>
    %208 = math.tanh %202 : vector<2x128xf32>
    %209 = vector.extract_strided_slice %207 {offsets = [0, 0], sizes = [2, 32], strides = [1, 1]} : vector<2x128xf32> to vector<2x32xf32>
    %210 = vector.extract_strided_slice %207 {offsets = [0, 32], sizes = [2, 32], strides = [1, 1]} : vector<2x128xf32> to vector<2x32xf32>
    %211 = vector.extract_strided_slice %208 {offsets = [0, 64], sizes = [2, 32], strides = [1, 1]} : vector<2x128xf32> to vector<2x32xf32>
    %212 = vector.extract_strided_slice %207 {offsets = [0, 96], sizes = [2, 32], strides = [1, 1]} : vector<2x128xf32> to vector<2x32xf32>
    %213 = arith.mulf %210, %181 : vector<2x32xf32>
    %214 = arith.mulf %209, %211 : vector<2x32xf32>
    %215 = arith.addf %213, %214 : vector<2x32xf32>
    %216 = math.tanh %215 : vector<2x32xf32>
    %217 = arith.mulf %212, %216 : vector<2x32xf32>
    %218 = vector.extract_strided_slice %2 {offsets = [6, 0], sizes = [2, 32], strides = [1, 1]} : vector<16x32xf32> to vector<2x32xf32>
    %219 = arith.subf %217, %178 : vector<2x32xf32>
    %220 = arith.mulf %218, %219 : vector<2x32xf32>
    %221 = arith.addf %178, %220 : vector<2x32xf32>
    %222 = arith.subf %215, %181 : vector<2x32xf32>
    %223 = arith.mulf %218, %222 : vector<2x32xf32>
    %224 = arith.addf %181, %223 : vector<2x32xf32>
    %225 = vector.extract_strided_slice %8 {offsets = [10, 0], sizes = [2, 128], strides = [1, 1]} : vector<16x256xf32> to vector<2x128xf32>
    %cst_32 = arith.constant dense<0.000000e+00> : vector<2x128xf32>
    %226 = tpu.matmul %199, %0, %cst_32 {dimension_numbers = #tpu.dot_dimension_numbers<[1], [0], [0], [1], [0, 0, 1, 1], [], []>} : vector<2x32xf32>, vector<32x128xf32>, vector<2x128xf32> -> vector<2x128xf32>
    %227 = arith.addf %225, %226 : vector<2x128xf32>
    %228 = arith.negf %227 : vector<2x128xf32>
    %229 = math.exp %228 : vector<2x128xf32>
    %cst_33 = arith.constant 1.000000e+00 : f32
    %230 = vector.broadcast %cst_33 : f32 to vector<2x128xf32>
    %231 = arith.addf %230, %229 : vector<2x128xf32>
    %232 = arith.divf %230, %231 : vector<2x128xf32>
    %233 = math.tanh %227 : vector<2x128xf32>
    %234 = vector.extract_strided_slice %232 {offsets = [0, 0], sizes = [2, 32], strides = [1, 1]} : vector<2x128xf32> to vector<2x32xf32>
    %235 = vector.extract_strided_slice %232 {offsets = [0, 32], sizes = [2, 32], strides = [1, 1]} : vector<2x128xf32> to vector<2x32xf32>
    %236 = vector.extract_strided_slice %233 {offsets = [0, 64], sizes = [2, 32], strides = [1, 1]} : vector<2x128xf32> to vector<2x32xf32>
    %237 = vector.extract_strided_slice %232 {offsets = [0, 96], sizes = [2, 32], strides = [1, 1]} : vector<2x128xf32> to vector<2x32xf32>
    %238 = arith.mulf %235, %197 : vector<2x32xf32>
    %239 = arith.mulf %234, %236 : vector<2x32xf32>
    %240 = arith.addf %238, %239 : vector<2x32xf32>
    %241 = math.tanh %240 : vector<2x32xf32>
    %242 = arith.mulf %237, %241 : vector<2x32xf32>
    %243 = vector.extract_strided_slice %8 {offsets = [4, 128], sizes = [2, 128], strides = [1, 1]} : vector<16x256xf32> to vector<2x128xf32>
    %cst_34 = arith.constant dense<0.000000e+00> : vector<2x128xf32>
    %244 = tpu.matmul %221, %1, %cst_34 {dimension_numbers = #tpu.dot_dimension_numbers<[1], [0], [0], [1], [0, 0, 1, 1], [], []>} : vector<2x32xf32>, vector<32x128xf32>, vector<2x128xf32> -> vector<2x128xf32>
    %245 = arith.addf %243, %244 : vector<2x128xf32>
    %246 = arith.negf %245 : vector<2x128xf32>
    %247 = math.exp %246 : vector<2x128xf32>
    %cst_35 = arith.constant 1.000000e+00 : f32
    %248 = vector.broadcast %cst_35 : f32 to vector<2x128xf32>
    %249 = arith.addf %248, %247 : vector<2x128xf32>
    %250 = arith.divf %248, %249 : vector<2x128xf32>
    %251 = math.tanh %245 : vector<2x128xf32>
    %252 = vector.extract_strided_slice %250 {offsets = [0, 0], sizes = [2, 32], strides = [1, 1]} : vector<2x128xf32> to vector<2x32xf32>
    %253 = vector.extract_strided_slice %250 {offsets = [0, 32], sizes = [2, 32], strides = [1, 1]} : vector<2x128xf32> to vector<2x32xf32>
    %254 = vector.extract_strided_slice %251 {offsets = [0, 64], sizes = [2, 32], strides = [1, 1]} : vector<2x128xf32> to vector<2x32xf32>
    %255 = vector.extract_strided_slice %250 {offsets = [0, 96], sizes = [2, 32], strides = [1, 1]} : vector<2x128xf32> to vector<2x32xf32>
    %256 = arith.mulf %253, %224 : vector<2x32xf32>
    %257 = arith.mulf %252, %254 : vector<2x32xf32>
    %258 = arith.addf %256, %257 : vector<2x32xf32>
    %259 = math.tanh %258 : vector<2x32xf32>
    %260 = arith.mulf %255, %259 : vector<2x32xf32>
    %261 = vector.extract_strided_slice %2 {offsets = [4, 0], sizes = [2, 32], strides = [1, 1]} : vector<16x32xf32> to vector<2x32xf32>
    %262 = arith.subf %260, %221 : vector<2x32xf32>
    %263 = arith.mulf %261, %262 : vector<2x32xf32>
    %264 = arith.addf %221, %263 : vector<2x32xf32>
    %265 = arith.subf %258, %224 : vector<2x32xf32>
    %266 = arith.mulf %261, %265 : vector<2x32xf32>
    %267 = arith.addf %224, %266 : vector<2x32xf32>
    %268 = vector.extract_strided_slice %8 {offsets = [12, 0], sizes = [2, 128], strides = [1, 1]} : vector<16x256xf32> to vector<2x128xf32>
    %cst_36 = arith.constant dense<0.000000e+00> : vector<2x128xf32>
    %269 = tpu.matmul %242, %0, %cst_36 {dimension_numbers = #tpu.dot_dimension_numbers<[1], [0], [0], [1], [0, 0, 1, 1], [], []>} : vector<2x32xf32>, vector<32x128xf32>, vector<2x128xf32> -> vector<2x128xf32>
    %270 = arith.addf %268, %269 : vector<2x128xf32>
    %271 = arith.negf %270 : vector<2x128xf32>
    %272 = math.exp %271 : vector<2x128xf32>
    %cst_37 = arith.constant 1.000000e+00 : f32
    %273 = vector.broadcast %cst_37 : f32 to vector<2x128xf32>
    %274 = arith.addf %273, %272 : vector<2x128xf32>
    %275 = arith.divf %273, %274 : vector<2x128xf32>
    %276 = math.tanh %270 : vector<2x128xf32>
    %277 = vector.extract_strided_slice %275 {offsets = [0, 0], sizes = [2, 32], strides = [1, 1]} : vector<2x128xf32> to vector<2x32xf32>
    %278 = vector.extract_strided_slice %275 {offsets = [0, 32], sizes = [2, 32], strides = [1, 1]} : vector<2x128xf32> to vector<2x32xf32>
    %279 = vector.extract_strided_slice %276 {offsets = [0, 64], sizes = [2, 32], strides = [1, 1]} : vector<2x128xf32> to vector<2x32xf32>
    %280 = vector.extract_strided_slice %275 {offsets = [0, 96], sizes = [2, 32], strides = [1, 1]} : vector<2x128xf32> to vector<2x32xf32>
    %281 = arith.mulf %278, %240 : vector<2x32xf32>
    %282 = arith.mulf %277, %279 : vector<2x32xf32>
    %283 = arith.addf %281, %282 : vector<2x32xf32>
    %284 = math.tanh %283 : vector<2x32xf32>
    %285 = arith.mulf %280, %284 : vector<2x32xf32>
    %286 = vector.extract_strided_slice %8 {offsets = [2, 128], sizes = [2, 128], strides = [1, 1]} : vector<16x256xf32> to vector<2x128xf32>
    %cst_38 = arith.constant dense<0.000000e+00> : vector<2x128xf32>
    %287 = tpu.matmul %264, %1, %cst_38 {dimension_numbers = #tpu.dot_dimension_numbers<[1], [0], [0], [1], [0, 0, 1, 1], [], []>} : vector<2x32xf32>, vector<32x128xf32>, vector<2x128xf32> -> vector<2x128xf32>
    %288 = arith.addf %286, %287 : vector<2x128xf32>
    %289 = arith.negf %288 : vector<2x128xf32>
    %290 = math.exp %289 : vector<2x128xf32>
    %cst_39 = arith.constant 1.000000e+00 : f32
    %291 = vector.broadcast %cst_39 : f32 to vector<2x128xf32>
    %292 = arith.addf %291, %290 : vector<2x128xf32>
    %293 = arith.divf %291, %292 : vector<2x128xf32>
    %294 = math.tanh %288 : vector<2x128xf32>
    %295 = vector.extract_strided_slice %293 {offsets = [0, 0], sizes = [2, 32], strides = [1, 1]} : vector<2x128xf32> to vector<2x32xf32>
    %296 = vector.extract_strided_slice %293 {offsets = [0, 32], sizes = [2, 32], strides = [1, 1]} : vector<2x128xf32> to vector<2x32xf32>
    %297 = vector.extract_strided_slice %294 {offsets = [0, 64], sizes = [2, 32], strides = [1, 1]} : vector<2x128xf32> to vector<2x32xf32>
    %298 = vector.extract_strided_slice %293 {offsets = [0, 96], sizes = [2, 32], strides = [1, 1]} : vector<2x128xf32> to vector<2x32xf32>
    %299 = arith.mulf %296, %267 : vector<2x32xf32>
    %300 = arith.mulf %295, %297 : vector<2x32xf32>
    %301 = arith.addf %299, %300 : vector<2x32xf32>
    %302 = math.tanh %301 : vector<2x32xf32>
    %303 = arith.mulf %298, %302 : vector<2x32xf32>
    %304 = vector.extract_strided_slice %2 {offsets = [2, 0], sizes = [2, 32], strides = [1, 1]} : vector<16x32xf32> to vector<2x32xf32>
    %305 = arith.subf %303, %264 : vector<2x32xf32>
    %306 = arith.mulf %304, %305 : vector<2x32xf32>
    %307 = arith.addf %264, %306 : vector<2x32xf32>
    %308 = arith.subf %301, %267 : vector<2x32xf32>
    %309 = arith.mulf %304, %308 : vector<2x32xf32>
    %310 = arith.addf %267, %309 : vector<2x32xf32>
    %311 = vector.extract_strided_slice %8 {offsets = [14, 0], sizes = [2, 128], strides = [1, 1]} : vector<16x256xf32> to vector<2x128xf32>
    %cst_40 = arith.constant dense<0.000000e+00> : vector<2x128xf32>
    %312 = tpu.matmul %285, %0, %cst_40 {dimension_numbers = #tpu.dot_dimension_numbers<[1], [0], [0], [1], [0, 0, 1, 1], [], []>} : vector<2x32xf32>, vector<32x128xf32>, vector<2x128xf32> -> vector<2x128xf32>
    %313 = arith.addf %311, %312 : vector<2x128xf32>
    %314 = arith.negf %313 : vector<2x128xf32>
    %315 = math.exp %314 : vector<2x128xf32>
    %cst_41 = arith.constant 1.000000e+00 : f32
    %316 = vector.broadcast %cst_41 : f32 to vector<2x128xf32>
    %317 = arith.addf %316, %315 : vector<2x128xf32>
    %318 = arith.divf %316, %317 : vector<2x128xf32>
    %319 = math.tanh %313 : vector<2x128xf32>
    %320 = vector.extract_strided_slice %318 {offsets = [0, 0], sizes = [2, 32], strides = [1, 1]} : vector<2x128xf32> to vector<2x32xf32>
    %321 = vector.extract_strided_slice %318 {offsets = [0, 32], sizes = [2, 32], strides = [1, 1]} : vector<2x128xf32> to vector<2x32xf32>
    %322 = vector.extract_strided_slice %319 {offsets = [0, 64], sizes = [2, 32], strides = [1, 1]} : vector<2x128xf32> to vector<2x32xf32>
    %323 = vector.extract_strided_slice %318 {offsets = [0, 96], sizes = [2, 32], strides = [1, 1]} : vector<2x128xf32> to vector<2x32xf32>
    %324 = arith.mulf %321, %283 : vector<2x32xf32>
    %325 = arith.mulf %320, %322 : vector<2x32xf32>
    %326 = arith.addf %324, %325 : vector<2x32xf32>
    %327 = math.tanh %326 : vector<2x32xf32>
    %328 = arith.mulf %323, %327 : vector<2x32xf32>
    %329 = vector.extract_strided_slice %8 {offsets = [0, 128], sizes = [2, 128], strides = [1, 1]} : vector<16x256xf32> to vector<2x128xf32>
    %cst_42 = arith.constant dense<0.000000e+00> : vector<2x128xf32>
    %330 = tpu.matmul %307, %1, %cst_42 {dimension_numbers = #tpu.dot_dimension_numbers<[1], [0], [0], [1], [0, 0, 1, 1], [], []>} : vector<2x32xf32>, vector<32x128xf32>, vector<2x128xf32> -> vector<2x128xf32>
    %331 = arith.addf %329, %330 : vector<2x128xf32>
    %332 = arith.negf %331 : vector<2x128xf32>
    %333 = math.exp %332 : vector<2x128xf32>
    %cst_43 = arith.constant 1.000000e+00 : f32
    %334 = vector.broadcast %cst_43 : f32 to vector<2x128xf32>
    %335 = arith.addf %334, %333 : vector<2x128xf32>
    %336 = arith.divf %334, %335 : vector<2x128xf32>
    %337 = math.tanh %331 : vector<2x128xf32>
    %338 = vector.extract_strided_slice %336 {offsets = [0, 0], sizes = [2, 32], strides = [1, 1]} : vector<2x128xf32> to vector<2x32xf32>
    %339 = vector.extract_strided_slice %336 {offsets = [0, 32], sizes = [2, 32], strides = [1, 1]} : vector<2x128xf32> to vector<2x32xf32>
    %340 = vector.extract_strided_slice %337 {offsets = [0, 64], sizes = [2, 32], strides = [1, 1]} : vector<2x128xf32> to vector<2x32xf32>
    %341 = vector.extract_strided_slice %336 {offsets = [0, 96], sizes = [2, 32], strides = [1, 1]} : vector<2x128xf32> to vector<2x32xf32>
    %342 = arith.mulf %339, %310 : vector<2x32xf32>
    %343 = arith.mulf %338, %340 : vector<2x32xf32>
    %344 = arith.addf %342, %343 : vector<2x32xf32>
    %345 = math.tanh %344 : vector<2x32xf32>
    %346 = arith.mulf %341, %345 : vector<2x32xf32>
    %347 = tpu.concatenate %27, %70, %113, %156, %199, %242, %285, %328 in 0 : vector<2x32xf32>, vector<2x32xf32>, vector<2x32xf32>, vector<2x32xf32>, vector<2x32xf32>, vector<2x32xf32>, vector<2x32xf32>, vector<2x32xf32> -> vector<16x32xf32>
    %348 = arith.mulf %347, %2 : vector<16x32xf32>
    %349 = tpu.concatenate %346, %303, %260, %217, %174, %131, %88, %45 in 0 : vector<2x32xf32>, vector<2x32xf32>, vector<2x32xf32>, vector<2x32xf32>, vector<2x32xf32>, vector<2x32xf32>, vector<2x32xf32>, vector<2x32xf32> -> vector<16x32xf32>
    %350 = arith.mulf %349, %2 : vector<16x32xf32>
    %351 = tpu.concatenate %348, %350 in 1 : vector<16x32xf32>, vector<16x32xf32> -> vector<16x64xf32>
    %c0_44 = arith.constant 0 : index
    %c0_45 = arith.constant 0 : index
    %352 = vector.load %arg6[%c0_44, %c0_45] : memref<64x128xf32, #tpu.memory_space<vmem>>, vector<64x128xf32>
    %cst_46 = arith.constant dense<0.000000e+00> : vector<16x128xf32>
    %353 = tpu.matmul %351, %352, %cst_46 {dimension_numbers = #tpu.dot_dimension_numbers<[1], [0], [0], [1], [0, 0, 1, 1], [], []>} : vector<16x64xf32>, vector<64x128xf32>, vector<16x128xf32> -> vector<16x128xf32>
    %c0_47 = arith.constant 0 : index
    %c0_48 = arith.constant 0 : index
    %354 = vector.load %arg7[%c0_47, %c0_48] : memref<1x128xf32, #tpu.memory_space<vmem>>, vector<1x128xf32>
    %355 = vector.broadcast %354 : vector<1x128xf32> to vector<16x128xf32>
    %356 = arith.addf %353, %355 : vector<16x128xf32>
    %c0_49 = arith.constant 0 : index
    %c0_50 = arith.constant 0 : index
    %357 = vector.load %arg8[%c0_49, %c0_50] : memref<16x128xf32, #tpu.memory_space<vmem>>, vector<16x128xf32>
    tpu.vector_store %arg8[%c0_49, %c0_50], %356 {strides = array<i32>} : memref<16x128xf32, #tpu.memory_space<vmem>>, vector<16x128xf32>,
    return
  }
}

</mosaic_0001>

<llo_original>
// kernel: tpu_custom_call.1
$region0: #{tpu_custom_call.1}
  #allocation0 [shape = 'u32[]', space=smem, size = 0x4, offset = 0x4, fixed_abs, tag = 'smem constant byte address 0x4 - core index']
  #allocation1 [shape = 'u32[72,128]{1,0:T(1,128)}', space=vmem, size = 0x9000, scoped, tag = 'internal scratch']
  %s0 = inlined_call_operand.hbm [shape: f32[16,32], index: 0, kind: input, shape index: {}]
  %s1 = inlined_call_operand.hbm [shape: f32[16,32], index: 1, kind: input, shape index: {}]
  %s2 = inlined_call_operand.hbm [shape: f32[32,256], index: 2, kind: input, shape index: {}]
  %s3 = inlined_call_operand.vmem [shape: f32[1,256], index: 3, kind: input, shape index: {}]
  %s4 = inlined_call_operand.hbm [shape: f32[32,128], index: 4, kind: input, shape index: {}]
  %s5 = inlined_call_operand.hbm [shape: f32[32,128], index: 5, kind: input, shape index: {}]
  %s6 = inlined_call_operand.hbm [shape: f32[64,128], index: 6, kind: input, shape index: {}]
  %s7 = inlined_call_operand.vmem [shape: f32[1,128], index: 7, kind: input, shape index: {}]
  %s8 = inlined_call_operand.hbm [shape: f32[16,128], index: 8, kind: output, shape index: {}]
  %s9 = sld [smem:[#allocation0]]
  $region66: #{tpu_custom_call.1} parent=0
    _
  %s11 = ssub.s32 1, %s9
  %s12 = scalar_select 0, %s11, %s9
  $region1: #{tpu_custom_call.1} parent=0
    #allocation2 [shape = 'u8[8192]{0}', space=vmem, size = 0x2000, scoped, tag = 'input window, operand 0, single buffered']
    #allocation3 [shape = 's32[1]{0}', space=sflag, size = 0x4, scoped, tag = 'scoped memory for tpu_custom_call.1']
    #allocation4 [shape = 's32[1]{0}', space=sflag, size = 0x4, scoped, tag = 'scoped memory for tpu_custom_call.1']
    #allocation5 [shape = 'u8[8192]{0}', space=vmem, size = 0x2000, scoped, tag = 'input window, operand 1, single buffered']
    #allocation6 [shape = 's32[1]{0}', space=sflag, size = 0x4, scoped, tag = 'scoped memory for tpu_custom_call.1']
    #allocation7 [shape = 'u8[32768]{0}', space=vmem, size = 0x8000, scoped, tag = 'input window, operand 2, single buffered']
    #allocation8 [shape = 'u8[16384]{0}', space=vmem, size = 0x4000, scoped, tag = 'input window, operand 4, single buffered']
    #allocation9 [shape = 's32[1]{0}', space=sflag, size = 0x4, scoped, tag = 'scoped memory for tpu_custom_call.1']
    #allocation10 [shape = 'u8[16384]{0}', space=vmem, size = 0x4000, scoped, tag = 'input window, operand 5, single buffered']
    #allocation11 [shape = 'u8[32768]{0}', space=vmem, size = 0x8000, scoped, tag = 'input window, operand 6, single buffered']
    #allocation12 [shape = 's32[1]{0}', space=sflag, size = 0x4, scoped, tag = 'scoped memory for tpu_custom_call.1']
    #allocation13 [shape = 'u8[8192]{0}', space=vmem, size = 0x2000, scoped, tag = 'output window, operand 0, single buffered']
    %13 = vsyncpa [#allocation3], 0
    %14 = vsyncpa [#allocation6], 0
    %15 = vsyncpa [#allocation9], 0
    %16 = vsyncpa [#allocation12], 0
    %17 = vsyncpa [#allocation4], 0
    // Predicated region
    $region2: #{tpu_custom_call.1} parent=1 // pred_check
      _
    $region3: #{tpu_custom_call.1} parent=1 // pred_check_branch
      %19 = sbr.rel (0) target = $region5
    $region4: #{tpu_custom_call.1} parent=1 // pred_region
      %21 = vsyncadd [#allocation3], 0
      %s22 = sshll.u32 %s0, 4
      %s23 = int_to_ptr.hbm [resolvable:$true] %s22
      %s24 = sshll.u32 [#allocation2], 4
      %s25 = int_to_ptr.vmem [resolvable:$true] %s24
      %30 = dma.hbm_to_vmem [thread:$0]  %s23, 256, %s25, [#allocation3], 128, 128, 8
    $region5: #{tpu_custom_call.1} parent=1 // pred_fallthru
      _
    // Predicated region
    $region6: #{tpu_custom_call.1} parent=1 // pred_check
      _
    $region7: #{tpu_custom_call.1} parent=1 // pred_check_branch
      %32 = sbr.rel (0) target = $region9
    $region8: #{tpu_custom_call.1} parent=1 // pred_region
      %34 = vsyncadd [#allocation6], 0
      %s35 = sshll.u32 %s1, 4
      %s36 = int_to_ptr.hbm [resolvable:$true] %s35
      %s37 = sshll.u32 [#allocation5], 4
      %s38 = int_to_ptr.vmem [resolvable:$true] %s37
      %43 = dma.hbm_to_vmem [thread:$0]  %s36, 256, %s38, [#allocation6], 128, 128, 8
    $region9: #{tpu_custom_call.1} parent=1 // pred_fallthru
      _
    // Predicated region
    $region10: #{tpu_custom_call.1} parent=1 // pred_check
      _
    $region11: #{tpu_custom_call.1} parent=1 // pred_check_branch
      %45 = sbr.rel (0) target = $region13
    $region12: #{tpu_custom_call.1} parent=1 // pred_region
      %47 = vsyncadd [#allocation6], 0
      %s48 = sshll.u32 %s2, 4
      %s49 = int_to_ptr.hbm [resolvable:$true] %s48
      %s50 = sshll.u32 [#allocation7], 4
      %s51 = int_to_ptr.vmem [resolvable:$true] %s50
      %56 = dma.hbm_to_vmem [thread:$0]  %s49, 1024, %s51, [#allocation6], 256, 256, 16
    $region13: #{tpu_custom_call.1} parent=1 // pred_fallthru
      _
    // Predicated region
    $region14: #{tpu_custom_call.1} parent=1 // pred_check
      _
    $region15: #{tpu_custom_call.1} parent=1 // pred_check_branch
      %58 = sbr.rel (0) target = $region17
    $region16: #{tpu_custom_call.1} parent=1 // pred_region
      _
    $region17: #{tpu_custom_call.1} parent=1 // pred_fallthru
      _
    // Predicated region
    $region18: #{tpu_custom_call.1} parent=1 // pred_check
      _
    $region19: #{tpu_custom_call.1} parent=1 // pred_check_branch
      %60 = sbr.rel (0) target = $region21
    $region20: #{tpu_custom_call.1} parent=1 // pred_region
      %62 = vsyncadd [#allocation9], 0
      %s63 = sshll.u32 %s4, 4
      %s64 = int_to_ptr.hbm [resolvable:$true] %s63
      %s65 = sshll.u32 [#allocation8], 4
      %s66 = int_to_ptr.vmem [resolvable:$true] %s65
      %71 = dma.hbm_to_vmem [thread:$0]  %s64, 512, %s66, [#allocation9], 128, 128, 8
    $region21: #{tpu_custom_call.1} parent=1 // pred_fallthru
      _
    // Predicated region
    $region22: #{tpu_custom_call.1} parent=1 // pred_check
      _
    $region23: #{tpu_custom_call.1} parent=1 // pred_check_branch
      %73 = sbr.rel (0) target = $region25
    $region24: #{tpu_custom_call.1} parent=1 // pred_region
      %75 = vsyncadd [#allocation9], 0
      %s76 = sshll.u32 %s5, 4
      %s77 = int_to_ptr.hbm [resolvable:$true] %s76
      %s78 = sshll.u32 [#allocation10], 4
      %s79 = int_to_ptr.vmem [resolvable:$true] %s78
      %84 = dma.hbm_to_vmem [thread:$0]  %s77, 512, %s79, [#allocation9], 128, 128, 8
    $region25: #{tpu_custom_call.1} parent=1 // pred_fallthru
      _
    // Predicated region
    $region26: #{tpu_custom_call.1} parent=1 // pred_check
      _
    $region27: #{tpu_custom_call.1} parent=1 // pred_check_branch
      %86 = sbr.rel (0) target = $region29
    $region28: #{tpu_custom_call.1} parent=1 // pred_region
      %88 = vsyncadd [#allocation12], 0
      %s89 = sshll.u32 %s6, 4
      %s90 = int_to_ptr.hbm [resolvable:$true] %s89
      %s91 = sshll.u32 [#allocation11], 4
      %s92 = int_to_ptr.vmem [resolvable:$true] %s91
      %97 = dma.hbm_to_vmem [thread:$0]  %s90, 1024, %s92, [#allocation12], 128, 128, 8
    $region29: #{tpu_custom_call.1} parent=1 // pred_fallthru
      _
    // Predicated region
    $region30: #{tpu_custom_call.1} parent=1 // pred_check
      _
    $region31: #{tpu_custom_call.1} parent=1 // pred_check_branch
      %99 = sbr.rel (0) target = $region33
    $region32: #{tpu_custom_call.1} parent=1 // pred_region
      _
    $region33: #{tpu_custom_call.1} parent=1 // pred_fallthru
      _
    // Predicated region
    $region34: #{tpu_custom_call.1} parent=1 // pred_check
      _
    $region35: #{tpu_custom_call.1} parent=1 // pred_check_branch
      %101 = sbr.rel (0) target = $region37
    $region36: #{tpu_custom_call.1} parent=1 // pred_region
      %103 = dma.done [#allocation3], 256
    $region37: #{tpu_custom_call.1} parent=1 // pred_fallthru
      _
    // Predicated region
    $region38: #{tpu_custom_call.1} parent=1 // pred_check
      _
    $region39: #{tpu_custom_call.1} parent=1 // pred_check_branch
      %105 = sbr.rel (0) target = $region41
    $region40: #{tpu_custom_call.1} parent=1 // pred_region
      %107 = dma.done [#allocation6], 256
    $region41: #{tpu_custom_call.1} parent=1 // pred_fallthru
      _
    // Predicated region
    $region42: #{tpu_custom_call.1} parent=1 // pred_check
      _
    $region43: #{tpu_custom_call.1} parent=1 // pred_check_branch
      %109 = sbr.rel (0) target = $region45
    $region44: #{tpu_custom_call.1} parent=1 // pred_region
      %111 = dma.done [#allocation6], 1024
    $region45: #{tpu_custom_call.1} parent=1 // pred_fallthru
      _
    // Predicated region
    $region46: #{tpu_custom_call.1} parent=1 // pred_check
      _
    $region47: #{tpu_custom_call.1} parent=1 // pred_check_branch
      %113 = sbr.rel (0) target = $region49
    $region48: #{tpu_custom_call.1} parent=1 // pred_region
      %115 = dma.done [#allocation9], 512
    $region49: #{tpu_custom_call.1} parent=1 // pred_fallthru
      _
    // Predicated region
    $region50: #{tpu_custom_call.1} parent=1 // pred_check
      _
    $region51: #{tpu_custom_call.1} parent=1 // pred_check_branch
      %117 = sbr.rel (0) target = $region53
    $region52: #{tpu_custom_call.1} parent=1 // pred_region
      %119 = dma.done [#allocation9], 512
    $region53: #{tpu_custom_call.1} parent=1 // pred_fallthru
      _
    // Predicated region
    $region54: #{tpu_custom_call.1} parent=1 // pred_check
      _
    $region55: #{tpu_custom_call.1} parent=1 // pred_check_branch
      %121 = sbr.rel (0) target = $region57
    $region56: #{tpu_custom_call.1} parent=1 // pred_region
      %123 = dma.done [#allocation12], 1024
    $region57: #{tpu_custom_call.1} parent=1 // pred_fallthru
      _
    %v124 = vld [vmem:[#allocation8] sm:$0xff]
    %v125 = vld [vmem:[#allocation8 + $0x8] sm:$0xff]
    %v126 = vld [vmem:[#allocation8 + $0x10] sm:$0xff]
    %v127 = vld [vmem:[#allocation8 + $0x18] sm:$0xff]
    %v128 = vld [vmem:[#allocation10] sm:$0xff]
    %v129 = vld [vmem:[#allocation10 + $0x8] sm:$0xff]
    %v130 = vld [vmem:[#allocation10 + $0x10] sm:$0xff]
    %v131 = vld [vmem:[#allocation10 + $0x18] sm:$0xff]
    %v132 = vld [vmem:[#allocation2] sm:$0xff]
    %v133 = vld [vmem:[#allocation2 + $0x8] sm:$0xff]
    %v134 = vld [vmem:[#allocation5] sm:$0xff]
    %v135 = vld [vmem:[#allocation5 + $0x8] sm:$0xff]
    %v136 = vld [vmem:[#allocation7] sm:$0xff]
    %v137 = vld [vmem:[#allocation7 + $0x8] sm:$0xff]
    %v138 = vld [vmem:[#allocation7 + $0x10] sm:$0xff]
    %v139 = vld [vmem:[#allocation7 + $0x18] sm:$0xff]
    %v140 = vld [vmem:[#allocation7 + $0x20] sm:$0xff]
    %v141 = vld [vmem:[#allocation7 + $0x28] sm:$0xff]
    %v142 = vld [vmem:[#allocation7 + $0x30] sm:$0xff]
    %v143 = vld [vmem:[#allocation7 + $0x38] sm:$0xff]
    %v144 = vld [vmem:[%s3] sm:$0x3]
    %v146 = vperm.slane %v144, 0
    %v147 = vperm.slane %v144, 1
    %vm150 = vcmask 261120
    %v152 = vsel %vm150, %v134, 0
    %v155 = vsel %vm150, %v135, 0
    %157 = vmatpush.msra.mxu0 0.0
    %158 = vmatpush.msra.mxu0 0.0
    %159 = vmatpush.msra.mxu0 0.0
    %160 = vmatpush.msra.mxu0 0.0
    %161 = vmatpush.msra.mxu0 0.0
    %162 = vmatpush.msra.mxu0 0.0
    %163 = vmatpush.msra.mxu0 0.0
    %164 = vmatpush.msra.mxu0 0.0
    %165 = vmatpush.msra.mxu0 0.0
    %166 = vmatpush.msra.mxu0 0.0
    %167 = vmatpush.msra.mxu0 0.0
    %168 = vmatpush.msra.mxu0 0.0
    %169 = vmatpush.msra.mxu0 %v142
    %170 = vmatpush.msra.mxu0 %v140
    %171 = vmatpush.msra.mxu0 %v138
    %172 = vmatpush.msra.mxu0 %v136
    %173 = vmatmul.f32.gmra.mxu0 %v152
    %v174 = vpop.f32.mrf.mxu0
    %v175 = vadd.f32 %v146, %v174
    %176 = vmatmul.f32.gmra.mxu0 %v155
    %v177 = vpop.f32.mrf.mxu0
    %v178 = vadd.f32 %v146, %v177
    %179 = vdwg.mxu0
    %180 = vmatpush.msra.mxu0 0.0
    %181 = vmatpush.msra.mxu0 0.0
    %182 = vmatpush.msra.mxu0 0.0
    %183 = vmatpush.msra.mxu0 0.0
    %184 = vmatpush.msra.mxu0 0.0
    %185 = vmatpush.msra.mxu0 0.0
    %186 = vmatpush.msra.mxu0 0.0
    %187 = vmatpush.msra.mxu0 0.0
    %188 = vmatpush.msra.mxu0 0.0
    %189 = vmatpush.msra.mxu0 0.0
    %190 = vmatpush.msra.mxu0 0.0
    %191 = vmatpush.msra.mxu0 0.0
    %192 = vmatpush.msra.mxu0 %v143
    %193 = vmatpush.msra.mxu0 %v141
    %194 = vmatpush.msra.mxu0 %v139
    %195 = vmatpush.msra.mxu0 %v137
    %196 = vmatmul.f32.gmra.mxu0 %v152
    %v197 = vpop.f32.mrf.mxu0
    %v198 = vadd.f32 %v147, %v197
    %199 = vmatmul.f32.gmra.mxu0 %v155
    %v200 = vpop.f32.mrf.mxu0
    %v201 = vadd.f32 %v147, %v200
    %202 = vdwg.mxu0
    %v204 = vsel %vm150, 0.0, 0
    %206 = vmatpush.msra.mxu0 0.0
    %207 = vmatpush.msra.mxu0 0.0
    %208 = vmatpush.msra.mxu0 0.0
    %209 = vmatpush.msra.mxu0 0.0
    %210 = vmatpush.msra.mxu0 0.0
    %211 = vmatpush.msra.mxu0 0.0
    %212 = vmatpush.msra.mxu0 0.0
    %213 = vmatpush.msra.mxu0 0.0
    %214 = vmatpush.msra.mxu0 0.0
    %215 = vmatpush.msra.mxu0 0.0
    %216 = vmatpush.msra.mxu0 0.0
    %217 = vmatpush.msra.mxu0 0.0
    %218 = vmatpush.msra.mxu0 %v127
    %219 = vmatpush.msra.mxu0 %v126
    %220 = vmatpush.msra.mxu0 %v125
    %221 = vmatpush.msra.mxu0 %v124
    %222 = vmatmul.f32.gmra.mxu0 %v204
    %v223 = vpop.f32.mrf.mxu0
    %v224 = vadd.f32 0.0, %v223
    %225 = vdwg.mxu0
    %v226 = vadd.f32 %v175, %v224
    %v227 = vxor.u32 %v226, 2147483648
    %v228 = vmul.f32 %v227, 1.442695
    %v229 = vpow.pop %v228
    %v230 = vadd.f32 %v229, 1.0
    %v231 = vrcp.pop %v230
    %v232 = vmul.f32 %v230, %v231
    %v233 = vsub.f32 1.0, %v232
    %v234 = vmul.f32 %v231, %v233
    %v235 = vadd.f32 %v231, %v234
    %vm236 = vweird.f32 %v230
    %vm237 = vweird.f32 %v231
    %vm238 = vmor %vm236, %vm237
    %v239 = vsel %vm238, %v231, %v235
    %v240 = vand.u32 2147483647, %v230
    %vm241 = vcmp.eq.f32.partialorder %v240, 8.507059e+37
    %v242 = vand.u32 %v230, 2147483648
    %v243 = vor.u32 1.1754944e-38, %v242
    %v244 = vsel %vm241, %v243, %v239
    %v245 = vmul.f32 1.0, %v244
    %v246 = vtanh.pop %v226
    %v247 = vmul.f32 %v245, 0.0
    %249 = vrot.lane.b32.xlu0 %v246, 64
    %v250 = vpop.permute.xlu0 %249
    %v252 = vmul.f32 %v245, %v250
    %254 = vrot.lane.b32.xlu0 %v252, 32
    %v255 = vpop.permute.xlu0 %254
    %v257 = vadd.f32 %v247, %v255
    %v258 = vtanh.pop %v257
    %260 = vrot.lane.b32.xlu0 %v258, 64
    %v261 = vpop.permute.xlu0 %260
    %v263 = vmul.f32 %v245, %v261
    %264 = vmatpush.msra.mxu0 0.0
    %265 = vmatpush.msra.mxu0 0.0
    %266 = vmatpush.msra.mxu0 0.0
    %267 = vmatpush.msra.mxu0 0.0
    %268 = vmatpush.msra.mxu0 0.0
    %269 = vmatpush.msra.mxu0 0.0
    %270 = vmatpush.msra.mxu0 0.0
    %271 = vmatpush.msra.mxu0 0.0
    %272 = vmatpush.msra.mxu0 0.0
    %273 = vmatpush.msra.mxu0 0.0
    %274 = vmatpush.msra.mxu0 0.0
    %275 = vmatpush.msra.mxu0 0.0
    %276 = vmatpush.msra.mxu0 %v131
    %277 = vmatpush.msra.mxu0 %v130
    %278 = vmatpush.msra.mxu0 %v129
    %279 = vmatpush.msra.mxu0 %v128
    %280 = vmatmul.f32.gmra.mxu0 %v204
    %v281 = vpop.f32.mrf.mxu0
    %v282 = vadd.f32 0.0, %v281
    %283 = vdwg.mxu0
    %v285 = vrot.slane %v282, 2
    %v287 = vadd.f32 %v201, %v285
    %v288 = vxor.u32 %v287, 2147483648
    %v289 = vmul.f32 %v288, 1.442695
    %v290 = vpow.pop %v289
    %v291 = vadd.f32 %v290, 1.0
    %v292 = vrcp.pop %v291
    %v293 = vmul.f32 %v291, %v292
    %v294 = vsub.f32 1.0, %v293
    %v295 = vmul.f32 %v292, %v294
    %v296 = vadd.f32 %v292, %v295
    %vm297 = vweird.f32 %v291
    %vm298 = vweird.f32 %v292
    %vm299 = vmor %vm297, %vm298
    %v300 = vsel %vm299, %v292, %v296
    %v301 = vand.u32 2147483647, %v291
    %vm302 = vcmp.eq.f32.partialorder %v301, 8.507059e+37
    %v303 = vand.u32 %v291, 2147483648
    %v304 = vor.u32 1.1754944e-38, %v303
    %v305 = vsel %vm302, %v304, %v300
    %v306 = vmul.f32 1.0, %v305
    %v307 = vtanh.pop %v287
    %v308 = vmul.f32 %v306, 0.0
    %310 = vrot.lane.b32.xlu0 %v307, 64
    %v311 = vpop.permute.xlu0 %310
    %v313 = vmul.f32 %v306, %v311
    %315 = vrot.lane.b32.xlu0 %v313, 32
    %v316 = vpop.permute.xlu0 %315
    %v318 = vadd.f32 %v308, %v316
    %v319 = vtanh.pop %v318
    %321 = vrot.lane.b32.xlu0 %v319, 64
    %v322 = vpop.permute.xlu0 %321
    %v324 = vmul.f32 %v306, %v322
    %326 = vrot.lane.b32.xlu0 %v324, 32
    %v327 = vpop.permute.xlu0 %326
    %v329 = vmul.f32 %v133, %v327
    %v330 = vadd.f32 %v329, 0.0
    %332 = vrot.lane.b32.xlu0 %v318, 96
    %v333 = vpop.permute.xlu0 %332
    %v335 = vmul.f32 %v133, %v333
    %v336 = vadd.f32 %v335, 0.0
    %338 = vrot.lane.b32.xlu0 %v263, 32
    %v339 = vpop.permute.xlu0 %338
    %v340 = vsel %vm150, %v339, 0
    %342 = vmatpush.msra.mxu0 0.0
    %343 = vmatpush.msra.mxu0 0.0
    %344 = vmatpush.msra.mxu0 0.0
    %345 = vmatpush.msra.mxu0 0.0
    %346 = vmatpush.msra.mxu0 0.0
    %347 = vmatpush.msra.mxu0 0.0
    %348 = vmatpush.msra.mxu0 0.0
    %349 = vmatpush.msra.mxu0 0.0
    %350 = vmatpush.msra.mxu0 0.0
    %351 = vmatpush.msra.mxu0 0.0
    %352 = vmatpush.msra.mxu0 0.0
    %353 = vmatpush.msra.mxu0 0.0
    %354 = vmatpush.msra.mxu0 %v127
    %355 = vmatpush.msra.mxu0 %v126
    %356 = vmatpush.msra.mxu0 %v125
    %357 = vmatpush.msra.mxu0 %v124
    %358 = vmatmul.f32.gmra.mxu0 %v340
    %v359 = vpop.f32.mrf.mxu0
    %v360 = vadd.f32 0.0, %v359
    %361 = vdwg.mxu0
    %v363 = vrot.slane %v360, 6
    %v365 = vadd.f32 %v175, %v363
    %v366 = vxor.u32 %v365, 2147483648
    %v367 = vmul.f32 %v366, 1.442695
    %v368 = vpow.pop %v367
    %v369 = vadd.f32 %v368, 1.0
    %v370 = vrcp.pop %v369
    %v371 = vmul.f32 %v369, %v370
    %v372 = vsub.f32 1.0, %v371
    %v373 = vmul.f32 %v370, %v372
    %v374 = vadd.f32 %v370, %v373
    %vm375 = vweird.f32 %v369
    %vm376 = vweird.f32 %v370
    %vm377 = vmor %vm375, %vm376
    %v378 = vsel %vm377, %v370, %v374
    %v379 = vand.u32 2147483647, %v369
    %vm380 = vcmp.eq.f32.partialorder %v379, 8.507059e+37
    %v381 = vand.u32 %v369, 2147483648
    %v382 = vor.u32 1.1754944e-38, %v381
    %v383 = vsel %vm380, %v382, %v378
    %v384 = vmul.f32 1.0, %v383
    %v385 = vtanh.pop %v365
    %v387 = vrot.slane %v257, 6
    %v389 = vmul.f32 %v384, %v387
    %391 = vrot.lane.b32.xlu0 %v385, 64
    %v392 = vpop.permute.xlu0 %391
    %v394 = vmul.f32 %v384, %v392
    %396 = vrot.lane.b32.xlu0 %v394, 32
    %v397 = vpop.permute.xlu0 %396
    %v399 = vadd.f32 %v389, %v397
    %v400 = vtanh.pop %v399
    %402 = vrot.lane.b32.xlu0 %v400, 64
    %v403 = vpop.permute.xlu0 %402
    %v405 = vmul.f32 %v384, %v403
    %v407 = vrot.slane %v330, 6
    %v408 = vsel %vm150, %v407, 0
    %410 = vmatpush.msra.mxu0 0.0
    %411 = vmatpush.msra.mxu0 0.0
    %412 = vmatpush.msra.mxu0 0.0
    %413 = vmatpush.msra.mxu0 0.0
    %414 = vmatpush.msra.mxu0 0.0
    %415 = vmatpush.msra.mxu0 0.0
    %416 = vmatpush.msra.mxu0 0.0
    %417 = vmatpush.msra.mxu0 0.0
    %418 = vmatpush.msra.mxu0 0.0
    %419 = vmatpush.msra.mxu0 0.0
    %420 = vmatpush.msra.mxu0 0.0
    %421 = vmatpush.msra.mxu0 0.0
    %422 = vmatpush.msra.mxu0 %v131
    %423 = vmatpush.msra.mxu0 %v130
    %424 = vmatpush.msra.mxu0 %v129
    %425 = vmatpush.msra.mxu0 %v128
    %426 = vmatmul.f32.gmra.mxu0 %v408
    %v427 = vpop.f32.mrf.mxu0
    %v428 = vadd.f32 0.0, %v427
    %429 = vdwg.mxu0
    %v431 = vrot.slane %v428, 4
    %v433 = vadd.f32 %v201, %v431
    %v434 = vxor.u32 %v433, 2147483648
    %v435 = vmul.f32 %v434, 1.442695
    %v436 = vpow.pop %v435
    %v437 = vadd.f32 %v436, 1.0
    %v438 = vrcp.pop %v437
    %v439 = vmul.f32 %v437, %v438
    %v440 = vsub.f32 1.0, %v439
    %v441 = vmul.f32 %v438, %v440
    %v442 = vadd.f32 %v438, %v441
    %vm443 = vweird.f32 %v437
    %vm444 = vweird.f32 %v438
    %vm445 = vmor %vm443, %vm444
    %v446 = vsel %vm445, %v438, %v442
    %v447 = vand.u32 2147483647, %v437
    %vm448 = vcmp.eq.f32.partialorder %v447, 8.507059e+37
    %v449 = vand.u32 %v437, 2147483648
    %v450 = vor.u32 1.1754944e-38, %v449
    %v451 = vsel %vm448, %v450, %v446
    %v452 = vmul.f32 1.0, %v451
    %v453 = vtanh.pop %v433
    %v455 = vrot.slane %v336, 2
    %456 = vrot.lane.b32.xlu0 %v455, 32
    %v457 = vpop.permute.xlu0 %456
    %v459 = vmul.f32 %v452, %v457
    %461 = vrot.lane.b32.xlu0 %v453, 64
    %v462 = vpop.permute.xlu0 %461
    %v464 = vmul.f32 %v452, %v462
    %466 = vrot.lane.b32.xlu0 %v464, 32
    %v467 = vpop.permute.xlu0 %466
    %v469 = vadd.f32 %v459, %v467
    %v470 = vtanh.pop %v469
    %472 = vrot.lane.b32.xlu0 %v470, 64
    %v473 = vpop.permute.xlu0 %472
    %v475 = vmul.f32 %v452, %v473
    %v476 = vrot.slane %v330, 2
    %477 = vrot.lane.b32.xlu0 %v476, 96
    %v478 = vpop.permute.xlu0 %477
    %v480 = vsub.f32 %v475, %v478
    %482 = vrot.lane.b32.xlu0 %v480, 32
    %v483 = vpop.permute.xlu0 %482
    %v485 = vmul.f32 %v133, %v483
    %v487 = vrot.slane %v485, 6
    %v489 = vadd.f32 %v330, %v487
    %v490 = vsub.f32 %v469, %v457
    %492 = vrot.lane.b32.xlu0 %v490, 96
    %v493 = vpop.permute.xlu0 %492
    %v495 = vmul.f32 %v133, %v493
    %v497 = vrot.slane %v495, 6
    %v499 = vadd.f32 %v336, %v497
    %v501 = vrot.slane %v405, 2
    %502 = vrot.lane.b32.xlu0 %v501, 32
    %v503 = vpop.permute.xlu0 %502
    %v504 = vsel %vm150, %v503, 0
    %506 = vmatpush.msra.mxu0 0.0
    %507 = vmatpush.msra.mxu0 0.0
    %508 = vmatpush.msra.mxu0 0.0
    %509 = vmatpush.msra.mxu0 0.0
    %510 = vmatpush.msra.mxu0 0.0
    %511 = vmatpush.msra.mxu0 0.0
    %512 = vmatpush.msra.mxu0 0.0
    %513 = vmatpush.msra.mxu0 0.0
    %514 = vmatpush.msra.mxu0 0.0
    %515 = vmatpush.msra.mxu0 0.0
    %516 = vmatpush.msra.mxu0 0.0
    %517 = vmatpush.msra.mxu0 0.0
    %518 = vmatpush.msra.mxu0 %v127
    %519 = vmatpush.msra.mxu0 %v126
    %520 = vmatpush.msra.mxu0 %v125
    %521 = vmatpush.msra.mxu0 %v124
    %522 = vmatmul.f32.gmra.mxu0 %v504
    %v523 = vpop.f32.mrf.mxu0
    %v524 = vadd.f32 0.0, %v523
    %525 = vdwg.mxu0
    %v527 = vrot.slane %v524, 4
    %v529 = vadd.f32 %v175, %v527
    %v530 = vxor.u32 %v529, 2147483648
    %v531 = vmul.f32 %v530, 1.442695
    %v532 = vpow.pop %v531
    %v533 = vadd.f32 %v532, 1.0
    %v534 = vrcp.pop %v533
    %v535 = vmul.f32 %v533, %v534
    %v536 = vsub.f32 1.0, %v535
    %v537 = vmul.f32 %v534, %v536
    %v538 = vadd.f32 %v534, %v537
    %vm539 = vweird.f32 %v533
    %vm540 = vweird.f32 %v534
    %vm541 = vmor %vm539, %vm540
    %v542 = vsel %vm541, %v534, %v538
    %v543 = vand.u32 2147483647, %v533
    %vm544 = vcmp.eq.f32.partialorder %v543, 8.507059e+37
    %v545 = vand.u32 %v533, 2147483648
    %v546 = vor.u32 1.1754944e-38, %v545
    %v547 = vsel %vm544, %v546, %v542
    %v548 = vmul.f32 1.0, %v547
    %v549 = vtanh.pop %v529
    %v551 = vrot.slane %v399, 6
    %v553 = vmul.f32 %v548, %v551
    %555 = vrot.lane.b32.xlu0 %v549, 64
    %v556 = vpop.permute.xlu0 %555
    %v558 = vmul.f32 %v548, %v556
    %560 = vrot.lane.b32.xlu0 %v558, 32
    %v561 = vpop.permute.xlu0 %560
    %v563 = vadd.f32 %v553, %v561
    %v564 = vtanh.pop %v563
    %566 = vrot.lane.b32.xlu0 %v564, 64
    %v567 = vpop.permute.xlu0 %566
    %v569 = vmul.f32 %v548, %v567
    %v571 = vrot.slane %v489, 6
    %v572 = vsel %vm150, %v571, 0
    %574 = vmatpush.msra.mxu0 0.0
    %575 = vmatpush.msra.mxu0 0.0
    %576 = vmatpush.msra.mxu0 0.0
    %577 = vmatpush.msra.mxu0 0.0
    %578 = vmatpush.msra.mxu0 0.0
    %579 = vmatpush.msra.mxu0 0.0
    %580 = vmatpush.msra.mxu0 0.0
    %581 = vmatpush.msra.mxu0 0.0
    %582 = vmatpush.msra.mxu0 0.0
    %583 = vmatpush.msra.mxu0 0.0
    %584 = vmatpush.msra.mxu0 0.0
    %585 = vmatpush.msra.mxu0 0.0
    %586 = vmatpush.msra.mxu0 %v131
    %587 = vmatpush.msra.mxu0 %v130
    %588 = vmatpush.msra.mxu0 %v129
    %589 = vmatpush.msra.mxu0 %v128
    %590 = vmatmul.f32.gmra.mxu0 %v572
    %v591 = vpop.f32.mrf.mxu0
    %v592 = vadd.f32 0.0, %v591
    %593 = vdwg.mxu0
    %v595 = vrot.slane %v592, 6
    %v597 = vadd.f32 %v201, %v595
    %v598 = vxor.u32 %v597, 2147483648
    %v599 = vmul.f32 %v598, 1.442695
    %v600 = vpow.pop %v599
    %v601 = vadd.f32 %v600, 1.0
    %v602 = vrcp.pop %v601
    %v603 = vmul.f32 %v601, %v602
    %v604 = vsub.f32 1.0, %v603
    %v605 = vmul.f32 %v602, %v604
    %v606 = vadd.f32 %v602, %v605
    %vm607 = vweird.f32 %v601
    %vm608 = vweird.f32 %v602
    %vm609 = vmor %vm607, %vm608
    %v610 = vsel %vm609, %v602, %v606
    %v611 = vand.u32 2147483647, %v601
    %vm612 = vcmp.eq.f32.partialorder %v611, 8.507059e+37
    %v613 = vand.u32 %v601, 2147483648
    %v614 = vor.u32 1.1754944e-38, %v613
    %v615 = vsel %vm612, %v614, %v610
    %v616 = vmul.f32 1.0, %v615
    %v617 = vtanh.pop %v597
    %v619 = vrot.slane %v499, 4
    %620 = vrot.lane.b32.xlu0 %v619, 32
    %v621 = vpop.permute.xlu0 %620
    %v623 = vmul.f32 %v616, %v621
    %625 = vrot.lane.b32.xlu0 %v617, 64
    %v626 = vpop.permute.xlu0 %625
    %v628 = vmul.f32 %v616, %v626
    %630 = vrot.lane.b32.xlu0 %v628, 32
    %v631 = vpop.permute.xlu0 %630
    %v633 = vadd.f32 %v623, %v631
    %v634 = vtanh.pop %v633
    %636 = vrot.lane.b32.xlu0 %v634, 64
    %v637 = vpop.permute.xlu0 %636
    %v639 = vmul.f32 %v616, %v637
    %v640 = vrot.slane %v489, 4
    %641 = vrot.lane.b32.xlu0 %v640, 96
    %v642 = vpop.permute.xlu0 %641
    %v644 = vsub.f32 %v639, %v642
    %646 = vrot.lane.b32.xlu0 %v644, 32
    %v647 = vpop.permute.xlu0 %646
    %v649 = vmul.f32 %v133, %v647
    %v651 = vrot.slane %v649, 4
    %v653 = vadd.f32 %v489, %v651
    %v654 = vsub.f32 %v633, %v621
    %656 = vrot.lane.b32.xlu0 %v654, 96
    %v657 = vpop.permute.xlu0 %656
    %v659 = vmul.f32 %v133, %v657
    %v661 = vrot.slane %v659, 4
    %v663 = vadd.f32 %v499, %v661
    %v665 = vrot.slane %v569, 4
    %666 = vrot.lane.b32.xlu0 %v665, 32
    %v667 = vpop.permute.xlu0 %666
    %v668 = vsel %vm150, %v667, 0
    %670 = vmatpush.msra.mxu0 0.0
    %671 = vmatpush.msra.mxu0 0.0
    %672 = vmatpush.msra.mxu0 0.0
    %673 = vmatpush.msra.mxu0 0.0
    %674 = vmatpush.msra.mxu0 0.0
    %675 = vmatpush.msra.mxu0 0.0
    %676 = vmatpush.msra.mxu0 0.0
    %677 = vmatpush.msra.mxu0 0.0
    %678 = vmatpush.msra.mxu0 0.0
    %679 = vmatpush.msra.mxu0 0.0
    %680 = vmatpush.msra.mxu0 0.0
    %681 = vmatpush.msra.mxu0 0.0
    %682 = vmatpush.msra.mxu0 %v127
    %683 = vmatpush.msra.mxu0 %v126
    %684 = vmatpush.msra.mxu0 %v125
    %685 = vmatpush.msra.mxu0 %v124
    %686 = vmatmul.f32.gmra.mxu0 %v668
    %v687 = vpop.f32.mrf.mxu0
    %v688 = vadd.f32 0.0, %v687
    %689 = vdwg.mxu0
    %v691 = vrot.slane %v688, 2
    %v693 = vadd.f32 %v175, %v691
    %v694 = vxor.u32 %v693, 2147483648
    %v695 = vmul.f32 %v694, 1.442695
    %v696 = vpow.pop %v695
    %v697 = vadd.f32 %v696, 1.0
    %v698 = vrcp.pop %v697
    %v699 = vmul.f32 %v697, %v698
    %v700 = vsub.f32 1.0, %v699
    %v701 = vmul.f32 %v698, %v700
    %v702 = vadd.f32 %v698, %v701
    %vm703 = vweird.f32 %v697
    %vm704 = vweird.f32 %v698
    %vm705 = vmor %vm703, %vm704
    %v706 = vsel %vm705, %v698, %v702
    %v707 = vand.u32 2147483647, %v697
    %vm708 = vcmp.eq.f32.partialorder %v707, 8.507059e+37
    %v709 = vand.u32 %v697, 2147483648
    %v710 = vor.u32 1.1754944e-38, %v709
    %v711 = vsel %vm708, %v710, %v706
    %v712 = vmul.f32 1.0, %v711
    %v713 = vtanh.pop %v693
    %v715 = vrot.slane %v563, 6
    %v717 = vmul.f32 %v712, %v715
    %719 = vrot.lane.b32.xlu0 %v713, 64
    %v720 = vpop.permute.xlu0 %719
    %v722 = vmul.f32 %v712, %v720
    %724 = vrot.lane.b32.xlu0 %v722, 32
    %v725 = vpop.permute.xlu0 %724
    %v727 = vadd.f32 %v717, %v725
    %v728 = vtanh.pop %v727
    %730 = vrot.lane.b32.xlu0 %v728, 64
    %v731 = vpop.permute.xlu0 %730
    %v733 = vmul.f32 %v712, %v731
    %v735 = vrot.slane %v653, 6
    %v736 = vsel %vm150, %v735, 0
    %738 = vmatpush.msra.mxu0 0.0
    %739 = vmatpush.msra.mxu0 0.0
    %740 = vmatpush.msra.mxu0 0.0
    %741 = vmatpush.msra.mxu0 0.0
    %742 = vmatpush.msra.mxu0 0.0
    %743 = vmatpush.msra.mxu0 0.0
    %744 = vmatpush.msra.mxu0 0.0
    %745 = vmatpush.msra.mxu0 0.0
    %746 = vmatpush.msra.mxu0 0.0
    %747 = vmatpush.msra.mxu0 0.0
    %748 = vmatpush.msra.mxu0 0.0
    %749 = vmatpush.msra.mxu0 0.0
    %750 = vmatpush.msra.mxu0 %v131
    %751 = vmatpush.msra.mxu0 %v130
    %752 = vmatpush.msra.mxu0 %v129
    %753 = vmatpush.msra.mxu0 %v128
    %754 = vmatmul.f32.gmra.mxu0 %v736
    %v755 = vpop.f32.mrf.mxu0
    %v756 = vadd.f32 0.0, %v755
    %757 = vdwg.mxu0
    %v758 = vadd.f32 %v201, %v756
    %v759 = vxor.u32 %v758, 2147483648
    %v760 = vmul.f32 %v759, 1.442695
    %v761 = vpow.pop %v760
    %v762 = vadd.f32 %v761, 1.0
    %v763 = vrcp.pop %v762
    %v764 = vmul.f32 %v762, %v763
    %v765 = vsub.f32 1.0, %v764
    %v766 = vmul.f32 %v763, %v765
    %v767 = vadd.f32 %v763, %v766
    %vm768 = vweird.f32 %v762
    %vm769 = vweird.f32 %v763
    %vm770 = vmor %vm768, %vm769
    %v771 = vsel %vm770, %v763, %v767
    %v772 = vand.u32 2147483647, %v762
    %vm773 = vcmp.eq.f32.partialorder %v772, 8.507059e+37
    %v774 = vand.u32 %v762, 2147483648
    %v775 = vor.u32 1.1754944e-38, %v774
    %v776 = vsel %vm773, %v775, %v771
    %v777 = vmul.f32 1.0, %v776
    %v778 = vtanh.pop %v758
    %v780 = vrot.slane %v663, 6
    %781 = vrot.lane.b32.xlu0 %v780, 32
    %v782 = vpop.permute.xlu0 %781
    %v784 = vmul.f32 %v777, %v782
    %786 = vrot.lane.b32.xlu0 %v778, 64
    %v787 = vpop.permute.xlu0 %786
    %v789 = vmul.f32 %v777, %v787
    %791 = vrot.lane.b32.xlu0 %v789, 32
    %v792 = vpop.permute.xlu0 %791
    %v794 = vadd.f32 %v784, %v792
    %v795 = vtanh.pop %v794
    %797 = vrot.lane.b32.xlu0 %v795, 64
    %v798 = vpop.permute.xlu0 %797
    %v800 = vmul.f32 %v777, %v798
    %801 = vrot.lane.b32.xlu0 %v735, 96
    %v802 = vpop.permute.xlu0 %801
    %v804 = vsub.f32 %v800, %v802
    %806 = vrot.lane.b32.xlu0 %v804, 32
    %v807 = vpop.permute.xlu0 %806
    %v809 = vmul.f32 %v133, %v807
    %v811 = vrot.slane %v809, 2
    %v813 = vadd.f32 %v653, %v811
    %v814 = vsub.f32 %v794, %v782
    %816 = vrot.lane.b32.xlu0 %v814, 96
    %v817 = vpop.permute.xlu0 %816
    %v819 = vmul.f32 %v133, %v817
    %v821 = vrot.slane %v819, 2
    %v823 = vadd.f32 %v663, %v821
    %v825 = vrot.slane %v733, 6
    %826 = vrot.lane.b32.xlu0 %v825, 32
    %v827 = vpop.permute.xlu0 %826
    %v828 = vsel %vm150, %v827, 0
    %830 = vmatpush.msra.mxu0 0.0
    %831 = vmatpush.msra.mxu0 0.0
    %832 = vmatpush.msra.mxu0 0.0
    %833 = vmatpush.msra.mxu0 0.0
    %834 = vmatpush.msra.mxu0 0.0
    %835 = vmatpush.msra.mxu0 0.0
    %836 = vmatpush.msra.mxu0 0.0
    %837 = vmatpush.msra.mxu0 0.0
    %838 = vmatpush.msra.mxu0 0.0
    %839 = vmatpush.msra.mxu0 0.0
    %840 = vmatpush.msra.mxu0 0.0
    %841 = vmatpush.msra.mxu0 0.0
    %842 = vmatpush.msra.mxu0 %v127
    %843 = vmatpush.msra.mxu0 %v126
    %844 = vmatpush.msra.mxu0 %v125
    %845 = vmatpush.msra.mxu0 %v124
    %846 = vmatmul.f32.gmra.mxu0 %v828
    %v847 = vpop.f32.mrf.mxu0
    %v848 = vadd.f32 0.0, %v847
    %849 = vdwg.mxu0
    %v850 = vadd.f32 %v178, %v848
    %v851 = vxor.u32 %v850, 2147483648
    %v852 = vmul.f32 %v851, 1.442695
    %v853 = vpow.pop %v852
    %v854 = vadd.f32 %v853, 1.0
    %v855 = vrcp.pop %v854
    %v856 = vmul.f32 %v854, %v855
    %v857 = vsub.f32 1.0, %v856
    %v858 = vmul.f32 %v855, %v857
    %v859 = vadd.f32 %v855, %v858
    %vm860 = vweird.f32 %v854
    %vm861 = vweird.f32 %v855
    %vm862 = vmor %vm860, %vm861
    %v863 = vsel %vm862, %v855, %v859
    %v864 = vand.u32 2147483647, %v854
    %vm865 = vcmp.eq.f32.partialorder %v864, 8.507059e+37
    %v866 = vand.u32 %v854, 2147483648
    %v867 = vor.u32 1.1754944e-38, %v866
    %v868 = vsel %vm865, %v867, %v863
    %v869 = vmul.f32 1.0, %v868
    %v870 = vtanh.pop %v850
    %v872 = vrot.slane %v727, 6
    %v874 = vmul.f32 %v869, %v872
    %876 = vrot.lane.b32.xlu0 %v870, 64
    %v877 = vpop.permute.xlu0 %876
    %v879 = vmul.f32 %v869, %v877
    %881 = vrot.lane.b32.xlu0 %v879, 32
    %v882 = vpop.permute.xlu0 %881
    %v884 = vadd.f32 %v874, %v882
    %v885 = vtanh.pop %v884
    %887 = vrot.lane.b32.xlu0 %v885, 64
    %v888 = vpop.permute.xlu0 %887
    %v890 = vmul.f32 %v869, %v888
    %v892 = vrot.slane %v813, 6
    %v893 = vsel %vm150, %v892, 0
    %895 = vmatpush.msra.mxu0 0.0
    %896 = vmatpush.msra.mxu0 0.0
    %897 = vmatpush.msra.mxu0 0.0
    %898 = vmatpush.msra.mxu0 0.0
    %899 = vmatpush.msra.mxu0 0.0
    %900 = vmatpush.msra.mxu0 0.0
    %901 = vmatpush.msra.mxu0 0.0
    %902 = vmatpush.msra.mxu0 0.0
    %903 = vmatpush.msra.mxu0 0.0
    %904 = vmatpush.msra.mxu0 0.0
    %905 = vmatpush.msra.mxu0 0.0
    %906 = vmatpush.msra.mxu0 0.0
    %907 = vmatpush.msra.mxu0 %v131
    %908 = vmatpush.msra.mxu0 %v130
    %909 = vmatpush.msra.mxu0 %v129
    %910 = vmatpush.msra.mxu0 %v128
    %911 = vmatmul.f32.gmra.mxu0 %v893
    %v912 = vpop.f32.mrf.mxu0
    %v913 = vadd.f32 0.0, %v912
    %914 = vdwg.mxu0
    %v916 = vrot.slane %v913, 2
    %v918 = vadd.f32 %v198, %v916
    %v919 = vxor.u32 %v918, 2147483648
    %v920 = vmul.f32 %v919, 1.442695
    %v921 = vpow.pop %v920
    %v922 = vadd.f32 %v921, 1.0
    %v923 = vrcp.pop %v922
    %v924 = vmul.f32 %v922, %v923
    %v925 = vsub.f32 1.0, %v924
    %v926 = vmul.f32 %v923, %v925
    %v927 = vadd.f32 %v923, %v926
    %vm928 = vweird.f32 %v922
    %vm929 = vweird.f32 %v923
    %vm930 = vmor %vm928, %vm929
    %v931 = vsel %vm930, %v923, %v927
    %v932 = vand.u32 2147483647, %v922
    %vm933 = vcmp.eq.f32.partialorder %v932, 8.507059e+37
    %v934 = vand.u32 %v922, 2147483648
    %v935 = vor.u32 1.1754944e-38, %v934
    %v936 = vsel %vm933, %v935, %v931
    %v937 = vmul.f32 1.0, %v936
    %v938 = vtanh.pop %v918
    %940 = vrot.lane.b32.xlu0 %v823, 32
    %v941 = vpop.permute.xlu0 %940
    %v943 = vmul.f32 %v937, %v941
    %945 = vrot.lane.b32.xlu0 %v938, 64
    %v946 = vpop.permute.xlu0 %945
    %v948 = vmul.f32 %v937, %v946
    %950 = vrot.lane.b32.xlu0 %v948, 32
    %v951 = vpop.permute.xlu0 %950
    %v953 = vadd.f32 %v943, %v951
    %v954 = vtanh.pop %v953
    %956 = vrot.lane.b32.xlu0 %v954, 64
    %v957 = vpop.permute.xlu0 %956
    %v959 = vmul.f32 %v937, %v957
    %960 = vrot.lane.b32.xlu0 %v813, 96
    %v961 = vpop.permute.xlu0 %960
    %v963 = vsub.f32 %v959, %v961
    %965 = vrot.lane.b32.xlu0 %v963, 32
    %v966 = vpop.permute.xlu0 %965
    %v968 = vmul.f32 %v132, %v966
    %v969 = vadd.f32 %v813, %v968
    %v970 = vsub.f32 %v953, %v941
    %972 = vrot.lane.b32.xlu0 %v970, 96
    %v973 = vpop.permute.xlu0 %972
    %v975 = vmul.f32 %v132, %v973
    %v976 = vadd.f32 %v823, %v975
    %978 = vrot.lane.b32.xlu0 %v890, 32
    %v979 = vpop.permute.xlu0 %978
    %v980 = vsel %vm150, %v979, 0
    %982 = vmatpush.msra.mxu0 0.0
    %983 = vmatpush.msra.mxu0 0.0
    %984 = vmatpush.msra.mxu0 0.0
    %985 = vmatpush.msra.mxu0 0.0
    %986 = vmatpush.msra.mxu0 0.0
    %987 = vmatpush.msra.mxu0 0.0
    %988 = vmatpush.msra.mxu0 0.0
    %989 = vmatpush.msra.mxu0 0.0
    %990 = vmatpush.msra.mxu0 0.0
    %991 = vmatpush.msra.mxu0 0.0
    %992 = vmatpush.msra.mxu0 0.0
    %993 = vmatpush.msra.mxu0 0.0
    %994 = vmatpush.msra.mxu0 %v127
    %995 = vmatpush.msra.mxu0 %v126
    %996 = vmatpush.msra.mxu0 %v125
    %997 = vmatpush.msra.mxu0 %v124
    %998 = vmatmul.f32.gmra.mxu0 %v980
    %v999 = vpop.f32.mrf.mxu0
    %v1000 = vadd.f32 0.0, %v999
    %1001 = vdwg.mxu0
    %v1003 = vrot.slane %v1000, 6
    %v1005 = vadd.f32 %v178, %v1003
    %v1006 = vxor.u32 %v1005, 2147483648
    %v1007 = vmul.f32 %v1006, 1.442695
    %v1008 = vpow.pop %v1007
    %v1009 = vadd.f32 %v1008, 1.0
    %v1010 = vrcp.pop %v1009
    %v1011 = vmul.f32 %v1009, %v1010
    %v1012 = vsub.f32 1.0, %v1011
    %v1013 = vmul.f32 %v1010, %v1012
    %v1014 = vadd.f32 %v1010, %v1013
    %vm1015 = vweird.f32 %v1009
    %vm1016 = vweird.f32 %v1010
    %vm1017 = vmor %vm1015, %vm1016
    %v1018 = vsel %vm1017, %v1010, %v1014
    %v1019 = vand.u32 2147483647, %v1009
    %vm1020 = vcmp.eq.f32.partialorder %v1019, 8.507059e+37
    %v1021 = vand.u32 %v1009, 2147483648
    %v1022 = vor.u32 1.1754944e-38, %v1021
    %v1023 = vsel %vm1020, %v1022, %v1018
    %v1024 = vmul.f32 1.0, %v1023
    %v1025 = vtanh.pop %v1005
    %v1027 = vrot.slane %v884, 6
    %v1029 = vmul.f32 %v1024, %v1027
    %1031 = vrot.lane.b32.xlu0 %v1025, 64
    %v1032 = vpop.permute.xlu0 %1031
    %v1034 = vmul.f32 %v1024, %v1032
    %1036 = vrot.lane.b32.xlu0 %v1034, 32
    %v1037 = vpop.permute.xlu0 %1036
    %v1039 = vadd.f32 %v1029, %v1037
    %v1040 = vtanh.pop %v1039
    %1042 = vrot.lane.b32.xlu0 %v1040, 64
    %v1043 = vpop.permute.xlu0 %1042
    %v1045 = vmul.f32 %v1024, %v1043
    %v1047 = vrot.slane %v969, 6
    %v1048 = vsel %vm150, %v1047, 0
    %1050 = vmatpush.msra.mxu0 0.0
    %1051 = vmatpush.msra.mxu0 0.0
    %1052 = vmatpush.msra.mxu0 0.0
    %1053 = vmatpush.msra.mxu0 0.0
    %1054 = vmatpush.msra.mxu0 0.0
    %1055 = vmatpush.msra.mxu0 0.0
    %1056 = vmatpush.msra.mxu0 0.0
    %1057 = vmatpush.msra.mxu0 0.0
    %1058 = vmatpush.msra.mxu0 0.0
    %1059 = vmatpush.msra.mxu0 0.0
    %1060 = vmatpush.msra.mxu0 0.0
    %1061 = vmatpush.msra.mxu0 0.0
    %1062 = vmatpush.msra.mxu0 %v131
    %1063 = vmatpush.msra.mxu0 %v130
    %1064 = vmatpush.msra.mxu0 %v129
    %1065 = vmatpush.msra.mxu0 %v128
    %1066 = vmatmul.f32.gmra.mxu0 %v1048
    %v1067 = vpop.f32.mrf.mxu0
    %v1068 = vadd.f32 0.0, %v1067
    %1069 = vdwg.mxu0
    %v1071 = vrot.slane %v1068, 4
    %v1073 = vadd.f32 %v198, %v1071
    %v1074 = vxor.u32 %v1073, 2147483648
    %v1075 = vmul.f32 %v1074, 1.442695
    %v1076 = vpow.pop %v1075
    %v1077 = vadd.f32 %v1076, 1.0
    %v1078 = vrcp.pop %v1077
    %v1079 = vmul.f32 %v1077, %v1078
    %v1080 = vsub.f32 1.0, %v1079
    %v1081 = vmul.f32 %v1078, %v1080
    %v1082 = vadd.f32 %v1078, %v1081
    %vm1083 = vweird.f32 %v1077
    %vm1084 = vweird.f32 %v1078
    %vm1085 = vmor %vm1083, %vm1084
    %v1086 = vsel %vm1085, %v1078, %v1082
    %v1087 = vand.u32 2147483647, %v1077
    %vm1088 = vcmp.eq.f32.partialorder %v1087, 8.507059e+37
    %v1089 = vand.u32 %v1077, 2147483648
    %v1090 = vor.u32 1.1754944e-38, %v1089
    %v1091 = vsel %vm1088, %v1090, %v1086
    %v1092 = vmul.f32 1.0, %v1091
    %v1093 = vtanh.pop %v1073
    %v1095 = vrot.slane %v976, 2
    %1096 = vrot.lane.b32.xlu0 %v1095, 32
    %v1097 = vpop.permute.xlu0 %1096
    %v1099 = vmul.f32 %v1092, %v1097
    %1101 = vrot.lane.b32.xlu0 %v1093, 64
    %v1102 = vpop.permute.xlu0 %1101
    %v1104 = vmul.f32 %v1092, %v1102
    %1106 = vrot.lane.b32.xlu0 %v1104, 32
    %v1107 = vpop.permute.xlu0 %1106
    %v1109 = vadd.f32 %v1099, %v1107
    %v1110 = vtanh.pop %v1109
    %1112 = vrot.lane.b32.xlu0 %v1110, 64
    %v1113 = vpop.permute.xlu0 %1112
    %v1115 = vmul.f32 %v1092, %v1113
    %v1116 = vrot.slane %v969, 2
    %1117 = vrot.lane.b32.xlu0 %v1116, 96
    %v1118 = vpop.permute.xlu0 %1117
    %v1120 = vsub.f32 %v1115, %v1118
    %1122 = vrot.lane.b32.xlu0 %v1120, 32
    %v1123 = vpop.permute.xlu0 %1122
    %v1125 = vmul.f32 %v132, %v1123
    %v1127 = vrot.slane %v1125, 6
    %v1129 = vadd.f32 %v969, %v1127
    %v1130 = vsub.f32 %v1109, %v1097
    %1132 = vrot.lane.b32.xlu0 %v1130, 96
    %v1133 = vpop.permute.xlu0 %1132
    %v1135 = vmul.f32 %v132, %v1133
    %v1137 = vrot.slane %v1135, 6
    %v1139 = vadd.f32 %v976, %v1137
    %v1141 = vrot.slane %v1045, 2
    %1142 = vrot.lane.b32.xlu0 %v1141, 32
    %v1143 = vpop.permute.xlu0 %1142
    %v1144 = vsel %vm150, %v1143, 0
    %1146 = vmatpush.msra.mxu0 0.0
    %1147 = vmatpush.msra.mxu0 0.0
    %1148 = vmatpush.msra.mxu0 0.0
    %1149 = vmatpush.msra.mxu0 0.0
    %1150 = vmatpush.msra.mxu0 0.0
    %1151 = vmatpush.msra.mxu0 0.0
    %1152 = vmatpush.msra.mxu0 0.0
    %1153 = vmatpush.msra.mxu0 0.0
    %1154 = vmatpush.msra.mxu0 0.0
    %1155 = vmatpush.msra.mxu0 0.0
    %1156 = vmatpush.msra.mxu0 0.0
    %1157 = vmatpush.msra.mxu0 0.0
    %1158 = vmatpush.msra.mxu0 %v127
    %1159 = vmatpush.msra.mxu0 %v126
    %1160 = vmatpush.msra.mxu0 %v125
    %1161 = vmatpush.msra.mxu0 %v124
    %1162 = vmatmul.f32.gmra.mxu0 %v1144
    %v1163 = vpop.f32.mrf.mxu0
    %v1164 = vadd.f32 0.0, %v1163
    %1165 = vdwg.mxu0
    %v1167 = vrot.slane %v1164, 4
    %v1169 = vadd.f32 %v178, %v1167
    %v1170 = vxor.u32 %v1169, 2147483648
    %v1171 = vmul.f32 %v1170, 1.442695
    %v1172 = vpow.pop %v1171
    %v1173 = vadd.f32 %v1172, 1.0
    %v1174 = vrcp.pop %v1173
    %v1175 = vmul.f32 %v1173, %v1174
    %v1176 = vsub.f32 1.0, %v1175
    %v1177 = vmul.f32 %v1174, %v1176
    %v1178 = vadd.f32 %v1174, %v1177
    %vm1179 = vweird.f32 %v1173
    %vm1180 = vweird.f32 %v1174
    %vm1181 = vmor %vm1179, %vm1180
    %v1182 = vsel %vm1181, %v1174, %v1178
    %v1183 = vand.u32 2147483647, %v1173
    %vm1184 = vcmp.eq.f32.partialorder %v1183, 8.507059e+37
    %v1185 = vand.u32 %v1173, 2147483648
    %v1186 = vor.u32 1.1754944e-38, %v1185
    %v1187 = vsel %vm1184, %v1186, %v1182
    %v1188 = vmul.f32 1.0, %v1187
    %v1189 = vtanh.pop %v1169
    %v1191 = vrot.slane %v1039, 6
    %v1193 = vmul.f32 %v1188, %v1191
    %1195 = vrot.lane.b32.xlu0 %v1189, 64
    %v1196 = vpop.permute.xlu0 %1195
    %v1198 = vmul.f32 %v1188, %v1196
    %1200 = vrot.lane.b32.xlu0 %v1198, 32
    %v1201 = vpop.permute.xlu0 %1200
    %v1203 = vadd.f32 %v1193, %v1201
    %v1204 = vtanh.pop %v1203
    %1206 = vrot.lane.b32.xlu0 %v1204, 64
    %v1207 = vpop.permute.xlu0 %1206
    %v1209 = vmul.f32 %v1188, %v1207
    %v1211 = vrot.slane %v1129, 6
    %v1212 = vsel %vm150, %v1211, 0
    %1214 = vmatpush.msra.mxu0 0.0
    %1215 = vmatpush.msra.mxu0 0.0
    %1216 = vmatpush.msra.mxu0 0.0
    %1217 = vmatpush.msra.mxu0 0.0
    %1218 = vmatpush.msra.mxu0 0.0
    %1219 = vmatpush.msra.mxu0 0.0
    %1220 = vmatpush.msra.mxu0 0.0
    %1221 = vmatpush.msra.mxu0 0.0
    %1222 = vmatpush.msra.mxu0 0.0
    %1223 = vmatpush.msra.mxu0 0.0
    %1224 = vmatpush.msra.mxu0 0.0
    %1225 = vmatpush.msra.mxu0 0.0
    %1226 = vmatpush.msra.mxu0 %v131
    %1227 = vmatpush.msra.mxu0 %v130
    %1228 = vmatpush.msra.mxu0 %v129
    %1229 = vmatpush.msra.mxu0 %v128
    %1230 = vmatmul.f32.gmra.mxu0 %v1212
    %v1231 = vpop.f32.mrf.mxu0
    %v1232 = vadd.f32 0.0, %v1231
    %1233 = vdwg.mxu0
    %v1235 = vrot.slane %v1232, 6
    %v1237 = vadd.f32 %v198, %v1235
    %v1238 = vxor.u32 %v1237, 2147483648
    %v1239 = vmul.f32 %v1238, 1.442695
    %v1240 = vpow.pop %v1239
    %v1241 = vadd.f32 %v1240, 1.0
    %v1242 = vrcp.pop %v1241
    %v1243 = vmul.f32 %v1241, %v1242
    %v1244 = vsub.f32 1.0, %v1243
    %v1245 = vmul.f32 %v1242, %v1244
    %v1246 = vadd.f32 %v1242, %v1245
    %vm1247 = vweird.f32 %v1241
    %vm1248 = vweird.f32 %v1242
    %vm1249 = vmor %vm1247, %vm1248
    %v1250 = vsel %vm1249, %v1242, %v1246
    %v1251 = vand.u32 2147483647, %v1241
    %vm1252 = vcmp.eq.f32.partialorder %v1251, 8.507059e+37
    %v1253 = vand.u32 %v1241, 2147483648
    %v1254 = vor.u32 1.1754944e-38, %v1253
    %v1255 = vsel %vm1252, %v1254, %v1250
    %v1256 = vmul.f32 1.0, %v1255
    %v1257 = vtanh.pop %v1237
    %v1259 = vrot.slane %v1139, 4
    %1260 = vrot.lane.b32.xlu0 %v1259, 32
    %v1261 = vpop.permute.xlu0 %1260
    %v1263 = vmul.f32 %v1256, %v1261
    %1265 = vrot.lane.b32.xlu0 %v1257, 64
    %v1266 = vpop.permute.xlu0 %1265
    %v1268 = vmul.f32 %v1256, %v1266
    %1270 = vrot.lane.b32.xlu0 %v1268, 32
    %v1271 = vpop.permute.xlu0 %1270
    %v1273 = vadd.f32 %v1263, %v1271
    %v1274 = vtanh.pop %v1273
    %1276 = vrot.lane.b32.xlu0 %v1274, 64
    %v1277 = vpop.permute.xlu0 %1276
    %v1279 = vmul.f32 %v1256, %v1277
    %v1280 = vrot.slane %v1129, 4
    %1281 = vrot.lane.b32.xlu0 %v1280, 96
    %v1282 = vpop.permute.xlu0 %1281
    %v1284 = vsub.f32 %v1279, %v1282
    %1286 = vrot.lane.b32.xlu0 %v1284, 32
    %v1287 = vpop.permute.xlu0 %1286
    %v1289 = vmul.f32 %v132, %v1287
    %v1291 = vrot.slane %v1289, 4
    %v1293 = vadd.f32 %v1129, %v1291
    %v1294 = vsub.f32 %v1273, %v1261
    %1296 = vrot.lane.b32.xlu0 %v1294, 96
    %v1297 = vpop.permute.xlu0 %1296
    %v1299 = vmul.f32 %v132, %v1297
    %v1301 = vrot.slane %v1299, 4
    %v1303 = vadd.f32 %v1139, %v1301
    %v1305 = vrot.slane %v1209, 4
    %1306 = vrot.lane.b32.xlu0 %v1305, 32
    %v1307 = vpop.permute.xlu0 %1306
    %v1308 = vsel %vm150, %v1307, 0
    %1310 = vmatpush.msra.mxu0 0.0
    %1311 = vmatpush.msra.mxu0 0.0
    %1312 = vmatpush.msra.mxu0 0.0
    %1313 = vmatpush.msra.mxu0 0.0
    %1314 = vmatpush.msra.mxu0 0.0
    %1315 = vmatpush.msra.mxu0 0.0
    %1316 = vmatpush.msra.mxu0 0.0
    %1317 = vmatpush.msra.mxu0 0.0
    %1318 = vmatpush.msra.mxu0 0.0
    %1319 = vmatpush.msra.mxu0 0.0
    %1320 = vmatpush.msra.mxu0 0.0
    %1321 = vmatpush.msra.mxu0 0.0
    %1322 = vmatpush.msra.mxu0 %v127
    %1323 = vmatpush.msra.mxu0 %v126
    %1324 = vmatpush.msra.mxu0 %v125
    %1325 = vmatpush.msra.mxu0 %v124
    %1326 = vmatmul.f32.gmra.mxu0 %v1308
    %v1327 = vpop.f32.mrf.mxu0
    %v1328 = vadd.f32 0.0, %v1327
    %1329 = vdwg.mxu0
    %v1331 = vrot.slane %v1328, 2
    %v1333 = vadd.f32 %v178, %v1331
    %v1334 = vxor.u32 %v1333, 2147483648
    %v1335 = vmul.f32 %v1334, 1.442695
    %v1336 = vpow.pop %v1335
    %v1337 = vadd.f32 %v1336, 1.0
    %v1338 = vrcp.pop %v1337
    %v1339 = vmul.f32 %v1337, %v1338
    %v1340 = vsub.f32 1.0, %v1339
    %v1341 = vmul.f32 %v1338, %v1340
    %v1342 = vadd.f32 %v1338, %v1341
    %vm1343 = vweird.f32 %v1337
    %vm1344 = vweird.f32 %v1338
    %vm1345 = vmor %vm1343, %vm1344
    %v1346 = vsel %vm1345, %v1338, %v1342
    %v1347 = vand.u32 2147483647, %v1337
    %vm1348 = vcmp.eq.f32.partialorder %v1347, 8.507059e+37
    %v1349 = vand.u32 %v1337, 2147483648
    %v1350 = vor.u32 1.1754944e-38, %v1349
    %v1351 = vsel %vm1348, %v1350, %v1346
    %v1352 = vmul.f32 1.0, %v1351
    %v1353 = vtanh.pop %v1333
    %v1355 = vrot.slane %v1203, 6
    %v1357 = vmul.f32 %v1352, %v1355
    %1359 = vrot.lane.b32.xlu0 %v1353, 64
    %v1360 = vpop.permute.xlu0 %1359
    %v1362 = vmul.f32 %v1352, %v1360
    %1364 = vrot.lane.b32.xlu0 %v1362, 32
    %v1365 = vpop.permute.xlu0 %1364
    %v1367 = vadd.f32 %v1357, %v1365
    %v1368 = vtanh.pop %v1367
    %1370 = vrot.lane.b32.xlu0 %v1368, 64
    %v1371 = vpop.permute.xlu0 %1370
    %v1373 = vmul.f32 %v1352, %v1371
    %v1375 = vrot.slane %v1293, 6
    %v1376 = vsel %vm150, %v1375, 0
    %1378 = vmatpush.msra.mxu0 0.0
    %1379 = vmatpush.msra.mxu0 0.0
    %1380 = vmatpush.msra.mxu0 0.0
    %1381 = vmatpush.msra.mxu0 0.0
    %1382 = vmatpush.msra.mxu0 0.0
    %1383 = vmatpush.msra.mxu0 0.0
    %1384 = vmatpush.msra.mxu0 0.0
    %1385 = vmatpush.msra.mxu0 0.0
    %1386 = vmatpush.msra.mxu0 0.0
    %1387 = vmatpush.msra.mxu0 0.0
    %1388 = vmatpush.msra.mxu0 0.0
    %1389 = vmatpush.msra.mxu0 0.0
    %1390 = vmatpush.msra.mxu0 %v131
    %1391 = vmatpush.msra.mxu0 %v130
    %1392 = vmatpush.msra.mxu0 %v129
    %1393 = vmatpush.msra.mxu0 %v128
    %1394 = vmatmul.f32.gmra.mxu0 %v1376
    %v1395 = vpop.f32.mrf.mxu0
    %v1396 = vadd.f32 0.0, %v1395
    %1397 = vdwg.mxu0
    %v1398 = vadd.f32 %v198, %v1396
    %v1399 = vxor.u32 %v1398, 2147483648
    %v1400 = vmul.f32 %v1399, 1.442695
    %v1401 = vpow.pop %v1400
    %v1402 = vadd.f32 %v1401, 1.0
    %v1403 = vrcp.pop %v1402
    %v1404 = vmul.f32 %v1402, %v1403
    %v1405 = vsub.f32 1.0, %v1404
    %v1406 = vmul.f32 %v1403, %v1405
    %v1407 = vadd.f32 %v1403, %v1406
    %vm1408 = vweird.f32 %v1402
    %vm1409 = vweird.f32 %v1403
    %vm1410 = vmor %vm1408, %vm1409
    %v1411 = vsel %vm1410, %v1403, %v1407
    %v1412 = vand.u32 2147483647, %v1402
    %vm1413 = vcmp.eq.f32.partialorder %v1412, 8.507059e+37
    %v1414 = vand.u32 %v1402, 2147483648
    %v1415 = vor.u32 1.1754944e-38, %v1414
    %v1416 = vsel %vm1413, %v1415, %v1411
    %v1417 = vmul.f32 1.0, %v1416
    %v1418 = vtanh.pop %v1398
    %v1420 = vrot.slane %v1303, 6
    %1421 = vrot.lane.b32.xlu0 %v1420, 32
    %v1422 = vpop.permute.xlu0 %1421
    %v1424 = vmul.f32 %v1417, %v1422
    %1426 = vrot.lane.b32.xlu0 %v1418, 64
    %v1427 = vpop.permute.xlu0 %1426
    %v1429 = vmul.f32 %v1417, %v1427
    %1431 = vrot.lane.b32.xlu0 %v1429, 32
    %v1432 = vpop.permute.xlu0 %1431
    %v1434 = vadd.f32 %v1424, %v1432
    %v1435 = vtanh.pop %v1434
    %1437 = vrot.lane.b32.xlu0 %v1435, 64
    %v1438 = vpop.permute.xlu0 %1437
    %v1440 = vmul.f32 %v1417, %v1438
    %vm1441 = vcmask 1041408
    %v1442 = vsel %vm1441, %v263, %v405
    %vm1443 = vcmask 1043456
    %v1444 = vsel %vm1443, %v1442, %v569
    %vm1445 = vcmask 1045504
    %v1446 = vsel %vm1445, %v1444, %v733
    %v1447 = vsel %vm1441, %v890, %v1045
    %v1448 = vsel %vm1443, %v1447, %v1209
    %v1449 = vsel %vm1445, %v1448, %v1373
    %1452 = vrot.lane.b32.xlu0 %v132, 96
    %v1453 = vpop.permute.xlu0 %1452
    %1454 = vrot.lane.b32.xlu0 %v133, 96
    %v1455 = vpop.permute.xlu0 %1454
    %v1458 = vmul.f32 %v1446, %v1453
    %v1459 = vmul.f32 %v1449, %v1455
    %v1460 = vsel %vm1441, %v1440, %v1279
    %v1461 = vsel %vm1443, %v1460, %v1115
    %v1462 = vsel %vm1445, %v1461, %v959
    %v1463 = vsel %vm1441, %v800, %v639
    %v1464 = vsel %vm1443, %v1463, %v475
    %v1465 = vsel %vm1445, %v1464, %v324
    %v1466 = vmul.f32 %v1462, %v1453
    %v1467 = vmul.f32 %v1465, %v1455
    %1470 = vrot.lane.b32.xlu0 %v1458, 32
    %v1471 = vpop.permute.xlu0 %1470
    %1472 = vrot.lane.b32.xlu0 %v1459, 32
    %v1473 = vpop.permute.xlu0 %1472
    %1478 = vrot.lane.b32.xlu0 %v1466, 64
    %v1479 = vpop.permute.xlu0 %1478
    %1480 = vrot.lane.b32.xlu0 %v1467, 64
    %v1481 = vpop.permute.xlu0 %1480
    %v1484 = vsel %vm150, %v1471, %v1479
    %v1485 = vsel %vm150, %v1473, %v1481
    %v1486 = vld [vmem:[#allocation11] sm:$0xff]
    %v1487 = vld [vmem:[#allocation11 + $0x8] sm:$0xff]
    %v1488 = vld [vmem:[#allocation11 + $0x10] sm:$0xff]
    %v1489 = vld [vmem:[#allocation11 + $0x18] sm:$0xff]
    %v1490 = vld [vmem:[#allocation11 + $0x20] sm:$0xff]
    %v1491 = vld [vmem:[#allocation11 + $0x28] sm:$0xff]
    %v1492 = vld [vmem:[#allocation11 + $0x30] sm:$0xff]
    %v1493 = vld [vmem:[#allocation11 + $0x38] sm:$0xff]
    %v1494 = vld [vmem:[%s7] sm:$0x1]
    %v1496 = vperm.slane %v1494, 0
    %vm1498 = vcmask 523264
    %v1500 = vsel %vm1498, %v1484, 0
    %v1503 = vsel %vm1498, %v1485, 0
    %1505 = vmatpush.msra.mxu0 0.0
    %1506 = vmatpush.msra.mxu0 0.0
    %1507 = vmatpush.msra.mxu0 0.0
    %1508 = vmatpush.msra.mxu0 0.0
    %1509 = vmatpush.msra.mxu0 0.0
    %1510 = vmatpush.msra.mxu0 0.0
    %1511 = vmatpush.msra.mxu0 0.0
    %1512 = vmatpush.msra.mxu0 0.0
    %1513 = vmatpush.msra.mxu0 %v1493
    %1514 = vmatpush.msra.mxu0 %v1492
    %1515 = vmatpush.msra.mxu0 %v1491
    %1516 = vmatpush.msra.mxu0 %v1490
    %1517 = vmatpush.msra.mxu0 %v1489
    %1518 = vmatpush.msra.mxu0 %v1488
    %1519 = vmatpush.msra.mxu0 %v1487
    %1520 = vmatpush.msra.mxu0 %v1486
    %1521 = vmatmul.f32.gmra.mxu0 %v1500
    %v1522 = vpop.f32.mrf.mxu0
    %v1523 = vadd.f32 %v1496, %v1522
    %1524 = vmatmul.f32.gmra.mxu0 %v1503
    %v1525 = vpop.f32.mrf.mxu0
    %v1526 = vadd.f32 %v1496, %v1525
    %1527 = vdwg.mxu0
    %1528 = vst [vmem:[#allocation13] sm:$0xff] %v1523
    %1529 = vst [vmem:[#allocation13 + $0x8] sm:$0xff] %v1526
    // Predicated region
    $region58: #{tpu_custom_call.1} parent=1 // pred_check
      _
    $region59: #{tpu_custom_call.1} parent=1 // pred_check_branch
      %1531 = sbr.rel (0) target = $region61
    $region60: #{tpu_custom_call.1} parent=1 // pred_region
      %1533 = vsyncadd [#allocation4], 0
      %s1534 = sshll.u32 [#allocation13], 4
      %s1535 = int_to_ptr.vmem [resolvable:$true] %s1534
      %s1536 = sshll.u32 %s8, 4
      %s1537 = int_to_ptr.hbm [resolvable:$true] %s1536
      %1542 = dma.vmem_to_hbm [thread:$0]  %s1535, 256, %s1537, [#allocation4], 128, 128, 8
    $region61: #{tpu_custom_call.1} parent=1 // pred_fallthru
      _
    // Predicated region
    $region62: #{tpu_custom_call.1} parent=1 // pred_check
      _
    $region63: #{tpu_custom_call.1} parent=1 // pred_check_branch
      %1544 = sbr.rel (0) target = $region65
    $region64: #{tpu_custom_call.1} parent=1 // pred_region
      %1546 = dma.done [#allocation4], 256
    $region65: #{tpu_custom_call.1} parent=1 // pred_fallthru
      _
    %1547 = vsyncpa [#allocation3], 1
    %1548 = vsyncpa [#allocation6], 1
    %1549 = vsyncpa [#allocation9], 1
    %1550 = vsyncpa [#allocation12], 1
    %1551 = vsyncpa [#allocation4], 1

</llo_original>
